<compile_context>
chip_gen: v6e
topology: v6e:2x2x1
jax: 0.10.0
libtpu: 0.0.40
codegen_flags: <defaults>
</compile_context>

<pallas_src>
from functools import partial

import jax
import jax.numpy as jnp
from jax.experimental import pallas as pl
from jax.experimental.pallas import tpu as pltpu


def lfq_kernel(x_ref, w_in_t_ref, b_in_ref, w_f_ref, b_f_ref, mask_ref,
               w_out_t_ref, b_out_ref,
               y_ref, idx_ref, psum_ref, ent_ref, sse_ref,
               *, codebook_scale, inv_temperature):
    nt = pl.program_id(1)

    # zero the per-batch accumulators at the first token tile of this batch row
    @pl.when(nt == 0)
    def _():
        psum_ref[...] = jnp.zeros_like(psum_ref)
        ent_ref[...] = jnp.zeros_like(ent_ref)
        sse_ref[...] = jnp.zeros_like(sse_ref)

    x = x_ref[0]                                                      # [D, TM]

    # project_in (tokens on the lane axis)
    z = jnp.dot(w_in_t_ref[...], x,
                preferred_element_type=jnp.float32) + b_in_ref[...]   # [Cd, TM]

    # binary quantization
    quant = jnp.where(z > 0, codebook_scale, -codebook_scale).astype(jnp.float32)

    # indices (big-endian bits -> integer code); exact in f32 for Cd <= 24
    bits = (z > 0).astype(jnp.float32)                                # [Cd, TM]
    idx = jnp.sum(bits * mask_ref[...], axis=0, keepdims=True)        # [1, TM]
    idx_ref[...] = idx.astype(jnp.int32)[None]                        # (1,1,TM)

    # project_out (training straight-through forward value == quant)
    y = jnp.dot(w_out_t_ref[...], quant,
                preferred_element_type=jnp.float32) + b_out_ref[...]  # [D, TM]
    y_ref[...] = y[None]

    # softmax over the codebook axis (sublanes); the softmax-invariant ||z||^2
    # and ||c||^2 terms of the squared distance are dropped, and zc uses the
    # pre-fused weight W_f = codebook @ W_in^T (contraction depth D, not Cd).
    zc = jnp.dot(w_f_ref[...], x,
                 preferred_element_type=jnp.float32) + b_f_ref[...]   # [CS, TM]
    logits = (2.0 * inv_temperature) * zc
    m = jnp.max(logits, axis=0, keepdims=True)                        # [1, TM]
    e = jnp.exp(logits - m)                                           # [CS, TM]
    s = jnp.sum(e, axis=0, keepdims=True)                             # [1, TM]
    prob = e * pl.reciprocal(s, approx=True)                          # [CS, TM]

    # per-batch accumulators
    psum_ref[...] += jnp.sum(prob, axis=1, keepdims=True)[None]       # (1,CS,1)

    # sum_c -p log p via the log-sum-exp identity: one log per token
    h = (m + jnp.log(s)) - jnp.sum(prob * logits, axis=0, keepdims=True)  # [1, TM]
    ent_ref[...] += jnp.sum(h, axis=1, keepdims=True)[None]           # (1,1,1)

    diff = z - quant
    sse_row = jnp.sum(diff * diff, axis=0, keepdims=True)             # [1, TM]
    sse_ref[...] += jnp.sum(sse_row, axis=1, keepdims=True)[None]     # (1,1,1)


def lfvq_forward(x_img, params, *, codebook_scale=1.0, inv_temperature=1.0,
                 diversity_gamma=2.5, entropy_loss_weight=0.1,
                 commitment_loss_weight=1.0, tm=1024):
    B, D, H, W = x_img.shape
    N = H * W

    w_in, b_in = params["w_in"], params["b_in"]            # [D,Cd], [Cd]
    w_out, b_out = params["w_out"], params["b_out"]        # [Cd,D], [D]
    codebook, mask = params["codebook"], params["mask"]    # [CS,Cd], [Cd]
    Cd = w_in.shape[1]
    CS = codebook.shape[0]

    # token tile: as large as possible (per-grid-step overhead dominates small
    # tiles) but keep the [CS, tm] softmax intermediates comfortably inside
    # v7x's 64 MiB VMEM (v5e/v6e have 128 MiB and more scoped headroom).
    vmem_cap = max(128, (16 * 1024 * 1024) // (CS * 4 * 4) // 128 * 128)
    tm = min(tm, N, vmem_cap)
    assert N % tm == 0 and (tm == N or tm % 128 == 0)

    # kernel-side operand prep (tiny matrices; computed once outside the kernel)
    w_in_t = w_in.T                                        # [Cd, D]
    b_in_c = b_in.reshape(Cd, 1)                           # [Cd, 1]
    w_out_t = w_out.T                                      # [D, Cd]
    b_out_c = b_out.reshape(D, 1)                          # [D, 1]
    w_f = jnp.dot(codebook, w_in_t)                        # [CS, D]
    b_f = jnp.dot(codebook, b_in_c)                        # [CS, 1]
    mask_c = mask.reshape(Cd, 1)                           # [Cd, 1]

    # NCHW -> [B, D, N] is a contiguous reshape: no transpose / extra HBM pass
    x = x_img.reshape(B, D, N).astype(jnp.float32)

    kernel = partial(lfq_kernel, codebook_scale=codebook_scale,
                     inv_temperature=inv_temperature)

    out_shapes = (
        jax.ShapeDtypeStruct((B, D, N), jnp.float32),   # projected quantized tokens
        jax.ShapeDtypeStruct((B, 1, N), jnp.int32),     # indices (lane-dense)
        jax.ShapeDtypeStruct((B, CS, 1), jnp.float32),  # sum_n prob
        jax.ShapeDtypeStruct((B, 1, 1), jnp.float32),   # sum_n sum_c -p log p
        jax.ShapeDtypeStruct((B, 1, 1), jnp.float32),   # sum_n ||z - quant||^2
    )

    in_specs = [
        pl.BlockSpec((1, D, tm), lambda b, n: (b, 0, n)),   # x
        pl.BlockSpec((Cd, D), lambda b, n: (0, 0)),         # w_in^T
        pl.BlockSpec((Cd, 1), lambda b, n: (0, 0)),         # b_in (column)
        pl.BlockSpec((CS, D), lambda b, n: (0, 0)),         # codebook @ w_in^T
        pl.BlockSpec((CS, 1), lambda b, n: (0, 0)),         # codebook @ b_in
        pl.BlockSpec((Cd, 1), lambda b, n: (0, 0)),         # bit mask (column)
        pl.BlockSpec((D, Cd), lambda b, n: (0, 0)),         # w_out^T
        pl.BlockSpec((D, 1), lambda b, n: (0, 0)),          # b_out (column)
    ]
    out_specs = (
        pl.BlockSpec((1, D, tm), lambda b, n: (b, 0, n)),
        pl.BlockSpec((1, 1, tm), lambda b, n: (b, 0, n)),
        pl.BlockSpec((1, CS, 1), lambda b, n: (b, 0, 0)),
        pl.BlockSpec((1, 1, 1), lambda b, n: (b, 0, 0)),
        pl.BlockSpec((1, 1, 1), lambda b, n: (b, 0, 0)),
    )

    y, idx, prob_sum, ent_sum, sse_sum = pl.pallas_call(
        kernel,
        out_shape=out_shapes,
        grid_spec=pltpu.PrefetchScalarGridSpec(
            num_scalar_prefetch=0,
            grid=(B, N // tm),
            in_specs=in_specs,
            out_specs=out_specs,
        ),
        compiler_params=pltpu.CompilerParams(
            dimension_semantics=("parallel", "arbitrary")),
    )(x, w_in_t, b_in_c, w_f, b_f, mask_c, w_out_t, b_out_c)

    # final tiny scalar reductions -- matches the PyTorch .mean() conventions
    num_codebooks = 1
    per_sample_entropy = jnp.sum(ent_sum) / (B * N * num_codebooks * CS)
    avg_prob = prob_sum / N                                   # [B, CS, 1]
    codebook_entropy = jnp.mean(-avg_prob * jnp.log(jnp.maximum(avg_prob, 1e-20)))
    entropy_aux_loss = per_sample_entropy - diversity_gamma * codebook_entropy
    commit_loss = jnp.sum(sse_sum) / (B * N * num_codebooks * Cd)
    aux_loss = (entropy_aux_loss * entropy_loss_weight
                + commit_loss * commitment_loss_weight)

    # back to NCHW / [B, H, W] (contiguous reshapes only)
    y_img = y.reshape(B, D, H, W)
    indices = idx.reshape(B, H, W)
    return y_img, indices, aux_loss


def init_params(key, dim, codebook_size, codebook_scale=1.0):
    codebook_dim = int(jnp.log2(codebook_size))
    k1, k2, k3, k4 = jax.random.split(key, 4)
    lim_in = 1.0 / jnp.sqrt(dim)
    lim_out = 1.0 / jnp.sqrt(codebook_dim)
    # nn.Linear(dim, codebook_dim) / nn.Linear(codebook_dim, dim); stored as [in, out]
    w_in = jax.random.uniform(k1, (dim, codebook_dim), jnp.float32, -lim_in, lim_in)
    b_in = jax.random.uniform(k2, (codebook_dim,), jnp.float32, -lim_in, lim_in)
    w_out = jax.random.uniform(k3, (codebook_dim, dim), jnp.float32, -lim_out, lim_out)
    b_out = jax.random.uniform(k4, (dim,), jnp.float32, -lim_out, lim_out)

    mask_int = 2 ** jnp.arange(codebook_dim - 1, -1, -1, dtype=jnp.int32)   # big-endian
    codes = jnp.arange(codebook_size, dtype=jnp.int32)
    bits = ((codes[:, None] & mask_int[None, :]) != 0).astype(jnp.float32)  # [CS, Cd]
    codebook = bits * codebook_scale * 2.0 - codebook_scale                 # [CS, Cd]

    return dict(w_in=w_in, b_in=b_in, w_out=w_out, b_out=b_out,
                codebook=codebook, mask=mask_int.astype(jnp.float32))


if __name__ == "__main__":
    # LFVQ(dim=32, codebook_size=256) => codebook_dim=8, num_codebooks=1
    B, D, H, W = 2, 32, 16, 16
    CODEBOOK_SIZE = 256

    key = jax.random.PRNGKey(0)
    kx, kp = jax.random.split(key)
    x = jax.random.normal(kx, (B, D, H, W), jnp.float32)
    params = init_params(kp, D, CODEBOOK_SIZE)

    # TODO(synk): straight-through gradient (x - x.detach() + quantized) is a
    # backward-pass trick; only its forward value (== quantized) is reproduced.
    y, indices, aux_loss = lfvq_forward(x, params)
    jax.block_until_ready((y, indices, aux_loss))

    assert y.shape == (B, D, H, W)
    assert indices.shape == (B, H, W)
    assert aux_loss.shape == ()
    print("KERNEL_OK")
</pallas_src>

<mosaic_0001>
module attributes {stable_mosaic.version = 11 : i64} {
  func.func @lfq_kernel(%arg0: i32, %arg1: i32, %arg2: memref<1x32x256xf32, #tpu.memory_space<vmem>>, %arg3: memref<8x32xf32, #tpu.memory_space<vmem>>, %arg4: memref<8x1xf32, #tpu.memory_space<vmem>>, %arg5: memref<256x32xf32, #tpu.memory_space<vmem>>, %arg6: memref<256x1xf32, #tpu.memory_space<vmem>>, %arg7: memref<8x1xf32, #tpu.memory_space<vmem>>, %arg8: memref<32x8xf32, #tpu.memory_space<vmem>>, %arg9: memref<32x1xf32, #tpu.memory_space<vmem>>, %arg10: memref<1x32x256xf32, #tpu.memory_space<vmem>>, %arg11: memref<1x1x256xi32, #tpu.memory_space<vmem>>, %arg12: memref<1x256x1xf32, #tpu.memory_space<vmem>>, %arg13: memref<1x1x1xf32, #tpu.memory_space<vmem>>, %arg14: memref<1x1x1xf32, #tpu.memory_space<vmem>>) attributes {dimension_semantics = [#tpu.dimension_semantics<parallel>, #tpu.dimension_semantics<arbitrary>], iteration_bounds = array<i64: 2, 1>, scalar_prefetch = 0 : i64, scratch_operands = 0 : i64, tpu.core_type = #tpu.core_type<tc>, window_params = [{transform_indices = @transform_0, window_bounds = array<i64: 1, 32, 256>}, {pipeline_mode = #tpu.pipeline_mode<synchronous>, transform_indices = @transform_1, window_bounds = array<i64: 8, 32>}, {pipeline_mode = #tpu.pipeline_mode<synchronous>, transform_indices = @transform_2, window_bounds = array<i64: 8, 1>}, {pipeline_mode = #tpu.pipeline_mode<synchronous>, transform_indices = @transform_3, window_bounds = array<i64: 256, 32>}, {pipeline_mode = #tpu.pipeline_mode<synchronous>, transform_indices = @transform_4, window_bounds = array<i64: 256, 1>}, {pipeline_mode = #tpu.pipeline_mode<synchronous>, transform_indices = @transform_5, window_bounds = array<i64: 8, 1>}, {pipeline_mode = #tpu.pipeline_mode<synchronous>, transform_indices = @transform_6, window_bounds = array<i64: 32, 8>}, {pipeline_mode = #tpu.pipeline_mode<synchronous>, transform_indices = @transform_7, window_bounds = array<i64: 32, 1>}, {transform_indices = @transform_8, window_bounds = array<i64: 1, 32, 256>}, {transform_indices = @transform_9, window_bounds = array<i64: 1, 1, 256>}, {transform_indices = @transform_10, window_bounds = array<i64: 1, 256, 1>}, {transform_indices = @transform_11, window_bounds = array<i64: 1, 1, 1>}, {transform_indices = @transform_12, window_bounds = array<i64: 1, 1, 1>}]} {
    %c0_i32 = arith.constant 0 : i32
    %0 = arith.cmpi eq, %arg1, %c0_i32 : i32
    %1 = arith.extui %0 : i1 to i32
    %c0_i32_0 = arith.constant 0 : i32
    %2 = arith.cmpi ne, %1, %c0_i32_0 : i32
    scf.if %2 {
      %cst_56 = arith.constant 0.000000e+00 : f32
      %79 = vector.broadcast %cst_56 : f32 to vector<1x256x1xf32>
      %c0_57 = arith.constant 0 : index
      %c0_58 = arith.constant 0 : index
      %c0_59 = arith.constant 0 : index
      %80 = vector.load %arg12[%c0_57, %c0_58, %c0_59] : memref<1x256x1xf32, #tpu.memory_space<vmem>>, vector<1x256x1xf32>
      tpu.vector_store %arg12[%c0_57, %c0_58, %c0_59], %79 {strides = array<i32>} : memref<1x256x1xf32, #tpu.memory_space<vmem>>, vector<1x256x1xf32>,
      %cst_60 = arith.constant 0.000000e+00 : f32
      %81 = vector.broadcast %cst_60 : f32 to vector<1x1x1xf32>
      %c0_61 = arith.constant 0 : index
      %c0_62 = arith.constant 0 : index
      %c0_63 = arith.constant 0 : index
      %82 = vector.load %arg13[%c0_61, %c0_62, %c0_63] : memref<1x1x1xf32, #tpu.memory_space<vmem>>, vector<1x1x1xf32>
      tpu.vector_store %arg13[%c0_61, %c0_62, %c0_63], %81 {strides = array<i32>} : memref<1x1x1xf32, #tpu.memory_space<vmem>>, vector<1x1x1xf32>,
      %cst_64 = arith.constant 0.000000e+00 : f32
      %83 = vector.broadcast %cst_64 : f32 to vector<1x1x1xf32>
      %c0_65 = arith.constant 0 : index
      %c0_66 = arith.constant 0 : index
      %c0_67 = arith.constant 0 : index
      %84 = vector.load %arg14[%c0_65, %c0_66, %c0_67] : memref<1x1x1xf32, #tpu.memory_space<vmem>>, vector<1x1x1xf32>
      tpu.vector_store %arg14[%c0_65, %c0_66, %c0_67], %83 {strides = array<i32>} : memref<1x1x1xf32, #tpu.memory_space<vmem>>, vector<1x1x1xf32>,
    } else {
    }
    %c0 = arith.constant 0 : index
    %c0_1 = arith.constant 0 : index
    %c0_2 = arith.constant 0 : index
    %3 = vector.load %arg2[%c0, %c0_1, %c0_2] : memref<1x32x256xf32, #tpu.memory_space<vmem>>, vector<1x32x256xf32>
    %4 = vector.shape_cast %3 : vector<1x32x256xf32> to vector<32x256xf32>
    %c0_3 = arith.constant 0 : index
    %c0_4 = arith.constant 0 : index
    %5 = vector.load %arg3[%c0_3, %c0_4] : memref<8x32xf32, #tpu.memory_space<vmem>>, vector<8x32xf32>
    %cst = arith.constant dense<0.000000e+00> : vector<8x256xf32>
    %6 = tpu.matmul %5, %4, %cst {dimension_numbers = #tpu.dot_dimension_numbers<[1], [0], [0], [1], [0, 0, 1, 1], [], []>} : vector<8x32xf32>, vector<32x256xf32>, vector<8x256xf32> -> vector<8x256xf32>
    %c0_5 = arith.constant 0 : index
    %c0_6 = arith.constant 0 : index
    %7 = vector.load %arg4[%c0_5, %c0_6] : memref<8x1xf32, #tpu.memory_space<vmem>>, vector<8x1xf32>
    %8 = vector.broadcast %7 : vector<8x1xf32> to vector<8x256xf32>
    %9 = arith.addf %6, %8 : vector<8x256xf32>
    %cst_7 = arith.constant 0.000000e+00 : f32
    %10 = vector.broadcast %cst_7 : f32 to vector<8x256xf32>
    %11 = arith.cmpf ogt, %9, %10 : vector<8x256xf32>
    %cst_8 = arith.constant 1.000000e+00 : f32
    %cst_9 = arith.constant -1.000000e+00 : f32
    %12 = vector.broadcast %cst_8 : f32 to vector<8x256xf32>
    %13 = vector.broadcast %cst_9 : f32 to vector<8x256xf32>
    %14 = arith.select %11, %12, %13 : vector<8x256xi1>, vector<8x256xf32>
    %cst_10 = arith.constant 0.000000e+00 : f32
    %15 = vector.broadcast %cst_10 : f32 to vector<8x256xf32>
    %16 = arith.cmpf ogt, %9, %15 : vector<8x256xf32>
    %17 = arith.extui %16 : vector<8x256xi1> to vector<8x256xi32>
    %18 = arith.sitofp %17 : vector<8x256xi32> to vector<8x256xf32>
    %c0_11 = arith.constant 0 : index
    %c0_12 = arith.constant 0 : index
    %19 = vector.load %arg7[%c0_11, %c0_12] : memref<8x1xf32, #tpu.memory_space<vmem>>, vector<8x1xf32>
    %20 = vector.broadcast %19 : vector<8x1xf32> to vector<8x256xf32>
    %21 = arith.mulf %18, %20 : vector<8x256xf32>
    %cst_13 = arith.constant dense<0.000000e+00> : vector<256xf32>
    %22 = vector.multi_reduction <add>, %21, %cst_13 [0] : vector<8x256xf32> to vector<256xf32>
    %23 = vector.shape_cast %22 : vector<256xf32> to vector<1x256xf32>
    %24 = arith.fptosi %23 : vector<1x256xf32> to vector<1x256xi32>
    %25 = vector.shape_cast %24 : vector<1x256xi32> to vector<1x1x256xi32>
    %c0_14 = arith.constant 0 : index
    %c0_15 = arith.constant 0 : index
    %c0_16 = arith.constant 0 : index
    %26 = vector.load %arg11[%c0_14, %c0_15, %c0_16] : memref<1x1x256xi32, #tpu.memory_space<vmem>>, vector<1x1x256xi32>
    tpu.vector_store %arg11[%c0_14, %c0_15, %c0_16], %25 {strides = array<i32>} : memref<1x1x256xi32, #tpu.memory_space<vmem>>, vector<1x1x256xi32>,
    %c0_17 = arith.constant 0 : index
    %c0_18 = arith.constant 0 : index
    %27 = vector.load %arg8[%c0_17, %c0_18] : memref<32x8xf32, #tpu.memory_space<vmem>>, vector<32x8xf32>
    %cst_19 = arith.constant dense<0.000000e+00> : vector<32x256xf32>
    %28 = tpu.matmul %27, %14, %cst_19 {dimension_numbers = #tpu.dot_dimension_numbers<[1], [0], [0], [1], [0, 0, 1, 1], [], []>} : vector<32x8xf32>, vector<8x256xf32>, vector<32x256xf32> -> vector<32x256xf32>
    %c0_20 = arith.constant 0 : index
    %c0_21 = arith.constant 0 : index
    %29 = vector.load %arg9[%c0_20, %c0_21] : memref<32x1xf32, #tpu.memory_space<vmem>>, vector<32x1xf32>
    %30 = vector.broadcast %29 : vector<32x1xf32> to vector<32x256xf32>
    %31 = arith.addf %28, %30 : vector<32x256xf32>
    %32 = vector.shape_cast %31 : vector<32x256xf32> to vector<1x32x256xf32>
    %c0_22 = arith.constant 0 : index
    %c0_23 = arith.constant 0 : index
    %c0_24 = arith.constant 0 : index
    %33 = vector.load %arg10[%c0_22, %c0_23, %c0_24] : memref<1x32x256xf32, #tpu.memory_space<vmem>>, vector<1x32x256xf32>
    tpu.vector_store %arg10[%c0_22, %c0_23, %c0_24], %32 {strides = array<i32>} : memref<1x32x256xf32, #tpu.memory_space<vmem>>, vector<1x32x256xf32>,
    %c0_25 = arith.constant 0 : index
    %c0_26 = arith.constant 0 : index
    %34 = vector.load %arg5[%c0_25, %c0_26] : memref<256x32xf32, #tpu.memory_space<vmem>>, vector<256x32xf32>
    %cst_27 = arith.constant dense<0.000000e+00> : vector<256x256xf32>
    %35 = tpu.matmul %34, %4, %cst_27 {dimension_numbers = #tpu.dot_dimension_numbers<[1], [0], [0], [1], [0, 0, 1, 1], [], []>} : vector<256x32xf32>, vector<32x256xf32>, vector<256x256xf32> -> vector<256x256xf32>
    %c0_28 = arith.constant 0 : index
    %c0_29 = arith.constant 0 : index
    %36 = vector.load %arg6[%c0_28, %c0_29] : memref<256x1xf32, #tpu.memory_space<vmem>>, vector<256x1xf32>
    %37 = vector.broadcast %36 : vector<256x1xf32> to vector<256x256xf32>
    %38 = arith.addf %35, %37 : vector<256x256xf32>
    %cst_30 = arith.constant 2.000000e+00 : f32
    %39 = vector.broadcast %cst_30 : f32 to vector<256x256xf32>
    %40 = arith.mulf %39, %38 : vector<256x256xf32>
    %cst_31 = arith.constant dense<0xFF800000> : vector<256xf32>
    %41 = vector.multi_reduction <maximumf>, %40, %cst_31 [0] : vector<256x256xf32> to vector<256xf32>
    %42 = vector.shape_cast %41 : vector<256xf32> to vector<1x256xf32>
    %43 = vector.broadcast %42 : vector<1x256xf32> to vector<256x256xf32>
    %44 = arith.subf %40, %43 : vector<256x256xf32>
    %45 = math.exp %44 : vector<256x256xf32>
    %cst_32 = arith.constant dense<0.000000e+00> : vector<256xf32>
    %46 = vector.multi_reduction <add>, %45, %cst_32 [0] : vector<256x256xf32> to vector<256xf32>
    %47 = vector.shape_cast %46 : vector<256xf32> to vector<1x256xf32>
    %48 = tpu.reciprocal %47 {approx = true} : vector<1x256xf32> -> vector<1x256xf32>
    %49 = vector.broadcast %48 : vector<1x256xf32> to vector<256x256xf32>
    %50 = arith.mulf %45, %49 : vector<256x256xf32>
    %c0_33 = arith.constant 0 : index
    %c0_34 = arith.constant 0 : index
    %c0_35 = arith.constant 0 : index
    %51 = vector.load %arg12[%c0_33, %c0_34, %c0_35] : memref<1x256x1xf32, #tpu.memory_space<vmem>>, vector<1x256x1xf32>
    %cst_36 = arith.constant dense<0.000000e+00> : vector<256xf32>
    %52 = vector.multi_reduction <add>, %50, %cst_36 [1] : vector<256x256xf32> to vector<256xf32>
    %53 = vector.shape_cast %52 : vector<256xf32> to vector<256x1xf32>
    %54 = vector.shape_cast %53 : vector<256x1xf32> to vector<1x256x1xf32>
    %55 = arith.addf %51, %54 : vector<1x256x1xf32>
    %c0_37 = arith.constant 0 : index
    %c0_38 = arith.constant 0 : index
    %c0_39 = arith.constant 0 : index
    %56 = vector.load %arg12[%c0_37, %c0_38, %c0_39] : memref<1x256x1xf32, #tpu.memory_space<vmem>>, vector<1x256x1xf32>
    tpu.vector_store %arg12[%c0_37, %c0_38, %c0_39], %55 {strides = array<i32>} : memref<1x256x1xf32, #tpu.memory_space<vmem>>, vector<1x256x1xf32>,
    %57 = math.log %47 : vector<1x256xf32>
    %58 = arith.addf %42, %57 : vector<1x256xf32>
    %59 = arith.mulf %50, %40 : vector<256x256xf32>
    %cst_40 = arith.constant dense<0.000000e+00> : vector<256xf32>
    %60 = vector.multi_reduction <add>, %59, %cst_40 [0] : vector<256x256xf32> to vector<256xf32>
    %61 = vector.shape_cast %60 : vector<256xf32> to vector<1x256xf32>
    %62 = arith.subf %58, %61 : vector<1x256xf32>
    %c0_41 = arith.constant 0 : index
    %c0_42 = arith.constant 0 : index
    %c0_43 = arith.constant 0 : index
    %63 = vector.load %arg13[%c0_41, %c0_42, %c0_43] : memref<1x1x1xf32, #tpu.memory_space<vmem>>, vector<1x1x1xf32>
    %cst_44 = arith.constant dense<0.000000e+00> : vector<1xf32>
    %64 = vector.multi_reduction <add>, %62, %cst_44 [1] : vector<1x256xf32> to vector<1xf32>
    %65 = vector.shape_cast %64 : vector<1xf32> to vector<1x1xf32>
    %66 = vector.shape_cast %65 : vector<1x1xf32> to vector<1x1x1xf32>
    %67 = arith.addf %63, %66 : vector<1x1x1xf32>
    %c0_45 = arith.constant 0 : index
    %c0_46 = arith.constant 0 : index
    %c0_47 = arith.constant 0 : index
    %68 = vector.load %arg13[%c0_45, %c0_46, %c0_47] : memref<1x1x1xf32, #tpu.memory_space<vmem>>, vector<1x1x1xf32>
    tpu.vector_store %arg13[%c0_45, %c0_46, %c0_47], %67 {strides = array<i32>} : memref<1x1x1xf32, #tpu.memory_space<vmem>>, vector<1x1x1xf32>,
    %69 = arith.subf %9, %14 : vector<8x256xf32>
    %70 = arith.mulf %69, %69 : vector<8x256xf32>
    %cst_48 = arith.constant dense<0.000000e+00> : vector<256xf32>
    %71 = vector.multi_reduction <add>, %70, %cst_48 [0] : vector<8x256xf32> to vector<256xf32>
    %72 = vector.shape_cast %71 : vector<256xf32> to vector<1x256xf32>
    %c0_49 = arith.constant 0 : index
    %c0_50 = arith.constant 0 : index
    %c0_51 = arith.constant 0 : index
    %73 = vector.load %arg14[%c0_49, %c0_50, %c0_51] : memref<1x1x1xf32, #tpu.memory_space<vmem>>, vector<1x1x1xf32>
    %cst_52 = arith.constant dense<0.000000e+00> : vector<1xf32>
    %74 = vector.multi_reduction <add>, %72, %cst_52 [1] : vector<1x256xf32> to vector<1xf32>
    %75 = vector.shape_cast %74 : vector<1xf32> to vector<1x1xf32>
    %76 = vector.shape_cast %75 : vector<1x1xf32> to vector<1x1x1xf32>
    %77 = arith.addf %73, %76 : vector<1x1x1xf32>
    %c0_53 = arith.constant 0 : index
    %c0_54 = arith.constant 0 : index
    %c0_55 = arith.constant 0 : index
    %78 = vector.load %arg14[%c0_53, %c0_54, %c0_55] : memref<1x1x1xf32, #tpu.memory_space<vmem>>, vector<1x1x1xf32>
    tpu.vector_store %arg14[%c0_53, %c0_54, %c0_55], %77 {strides = array<i32>} : memref<1x1x1xf32, #tpu.memory_space<vmem>>, vector<1x1x1xf32>,
    return
  }
  func.func @transform_0(%arg0: i32, %arg1: i32) -> (i32, i32, i32) {
    %c0_i32 = arith.constant 0 : i32
    %c0_i32_0 = arith.constant 0 : i32
    return %arg0, %c0_i32, %arg1 : i32, i32, i32
  }
  func.func @transform_1(%arg0: i32, %arg1: i32) -> (i32, i32) {
    %c0_i32 = arith.constant 0 : i32
    %c0_i32_0 = arith.constant 0 : i32
    %c0_i32_1 = arith.constant 0 : i32
    return %c0_i32, %c0_i32_0 : i32, i32
  }
  func.func @transform_2(%arg0: i32, %arg1: i32) -> (i32, i32) {
    %c0_i32 = arith.constant 0 : i32
    %c0_i32_0 = arith.constant 0 : i32
    %c0_i32_1 = arith.constant 0 : i32
    return %c0_i32, %c0_i32_0 : i32, i32
  }
  func.func @transform_3(%arg0: i32, %arg1: i32) -> (i32, i32) {
    %c0_i32 = arith.constant 0 : i32
    %c0_i32_0 = arith.constant 0 : i32
    %c0_i32_1 = arith.constant 0 : i32
    return %c0_i32, %c0_i32_0 : i32, i32
  }
  func.func @transform_4(%arg0: i32, %arg1: i32) -> (i32, i32) {
    %c0_i32 = arith.constant 0 : i32
    %c0_i32_0 = arith.constant 0 : i32
    %c0_i32_1 = arith.constant 0 : i32
    return %c0_i32, %c0_i32_0 : i32, i32
  }
  func.func @transform_5(%arg0: i32, %arg1: i32) -> (i32, i32) {
    %c0_i32 = arith.constant 0 : i32
    %c0_i32_0 = arith.constant 0 : i32
    %c0_i32_1 = arith.constant 0 : i32
    return %c0_i32, %c0_i32_0 : i32, i32
  }
  func.func @transform_6(%arg0: i32, %arg1: i32) -> (i32, i32) {
    %c0_i32 = arith.constant 0 : i32
    %c0_i32_0 = arith.constant 0 : i32
    %c0_i32_1 = arith.constant 0 : i32
    return %c0_i32, %c0_i32_0 : i32, i32
  }
  func.func @transform_7(%arg0: i32, %arg1: i32) -> (i32, i32) {
    %c0_i32 = arith.constant 0 : i32
    %c0_i32_0 = arith.constant 0 : i32
    %c0_i32_1 = arith.constant 0 : i32
    return %c0_i32, %c0_i32_0 : i32, i32
  }
  func.func @transform_8(%arg0: i32, %arg1: i32) -> (i32, i32, i32) {
    %c0_i32 = arith.constant 0 : i32
    %c0_i32_0 = arith.constant 0 : i32
    return %arg0, %c0_i32, %arg1 : i32, i32, i32
  }
  func.func @transform_9(%arg0: i32, %arg1: i32) -> (i32, i32, i32) {
    %c0_i32 = arith.constant 0 : i32
    %c0_i32_0 = arith.constant 0 : i32
    return %arg0, %c0_i32, %arg1 : i32, i32, i32
  }
  func.func @transform_10(%arg0: i32, %arg1: i32) -> (i32, i32, i32) {
    %c0_i32 = arith.constant 0 : i32
    %c0_i32_0 = arith.constant 0 : i32
    %c0_i32_1 = arith.constant 0 : i32
    return %arg0, %c0_i32, %c0_i32_0 : i32, i32, i32
  }
  func.func @transform_11(%arg0: i32, %arg1: i32) -> (i32, i32, i32) {
    %c0_i32 = arith.constant 0 : i32
    %c0_i32_0 = arith.constant 0 : i32
    %c0_i32_1 = arith.constant 0 : i32
    return %arg0, %c0_i32, %c0_i32_0 : i32, i32, i32
  }
  func.func @transform_12(%arg0: i32, %arg1: i32) -> (i32, i32, i32) {
    %c0_i32 = arith.constant 0 : i32
    %c0_i32_0 = arith.constant 0 : i32
    %c0_i32_1 = arith.constant 0 : i32
    return %arg0, %c0_i32, %c0_i32_0 : i32, i32, i32
  }
}

</mosaic_0001>

<llo_original>
// kernel: tpu_custom_call.1
$region0: #{tpu_custom_call.1}
  #allocation0 [shape = 'u32[]', space=smem, size = 0x4, offset = 0x4, fixed_abs, tag = 'smem constant byte address 0x4 - core index']
  #allocation1 [shape = 'u32[144,128]{1,0:T(1,128)}', space=vmem, size = 0x12000, scoped, tag = 'internal scratch']
  %s0 = inlined_call_operand.vmem [shape: f32[2,32,256], index: 0, kind: input, shape index: {}]
  %s1 = inlined_call_operand.vmem [shape: f32[8,32], index: 1, kind: input, shape index: {}]
  %s2 = inlined_call_operand.vmem [shape: f32[8,1], index: 2, kind: input, shape index: {}]
  %s3 = inlined_call_operand.vmem [shape: f32[256,32], index: 3, kind: input, shape index: {}]
  %s4 = inlined_call_operand.vmem [shape: f32[256,1], index: 4, kind: input, shape index: {}]
  %s5 = inlined_call_operand.vmem [shape: f32[8,1], index: 5, kind: input, shape index: {}]
  %s6 = inlined_call_operand.vmem [shape: f32[32,8], index: 6, kind: input, shape index: {}]
  %s7 = inlined_call_operand.vmem [shape: f32[32,1], index: 7, kind: input, shape index: {}]
  %s8 = inlined_call_operand.hbm [shape: f32[2,32,256], index: 8, kind: output, shape index: {0}]
  %s9 = inlined_call_operand.hbm [shape: s32[2,1,256], index: 9, kind: output, shape index: {1}]
  %s10 = inlined_call_operand.vmem [shape: f32[2,256,1], index: 10, kind: output, shape index: {2}]
  %s11 = inlined_call_operand.vmem [shape: f32[2,1,1], index: 11, kind: output, shape index: {3}]
  %s12 = inlined_call_operand.vmem [shape: f32[2,1,1], index: 12, kind: output, shape index: {4}]
  %13 = xla_tuple %s8, %s9, %s10, %s11, %s12
  %s14 = sld [smem:[#allocation0]]
  $region101: #{tpu_custom_call.1} parent=0
    _
  %s16 = ssub.s32 1, %s14
  %s17 = scalar_select 0, %s16, %s14
  $region1: #{tpu_custom_call.1} parent=0
    #allocation2 [shape = 'u8[65536]{0}', space=vmem, size = 0x10000, scoped, tag = 'output window, operand 0']
    #allocation3 [shape = 's32[2]{0}', space=sflag, size = 0x8, scoped, tag = 'scoped memory for tpu_custom_call.1']
    #allocation4 [shape = 'u8[2048]{0}', space=vmem, size = 0x800, scoped, tag = 'output window, operand 1']
    #allocation5 [shape = 's32[2]{0}', space=sflag, size = 0x8, scoped, tag = 'scoped memory for tpu_custom_call.1']
    %18 = vsyncpa [#allocation3], 0
    %s19 = scalar_lea.sflag [#allocation3], 1
    %20 = vsyncpa %s19, 0
    %21 = vsyncpa [#allocation5], 0
    %s22 = scalar_lea.sflag [#allocation5], 1
    %23 = vsyncpa %s22, 0
    loop: start=0, step=1, limit=4
    $region2: #{tpu_custom_call.1} parent=1 // loop_pre_header
      _
    $region3: #{tpu_custom_call.1} parent=1 // loop_header
      %s25 = sphi 0, %s29
      %p26 = scmp.ge.s32.totalorder %s25, 4
      %s32 = sphi 0, %s44
      %s33 = sphi 0, %s40
      %s34 = sphi 0, %s32
      %s35 = sphi 0, %s33
      %s36 = sphi 0, %s34
      %s37 = sphi 0, %s35
      %s49 = sphi 0, %s51
      %s52 = sphi 0, %s49
      %s53 = sphi 0, %s52
      %s69 = sphi 0, %s53
      %s73 = sphi 0, %s73
      %s75 = sphi 0, %s73
      %s76 = sphi 0, %s75
      %s90 = sphi 0, %s76
      %s94 = sphi 0, %s94
      %s96 = sphi 0, %s94
      %s97 = sphi 0, %s96
      %s111 = sphi 0, %s97
      %s115 = sphi 0, %s115
      %s117 = sphi 0, %s115
      %s118 = sphi 0, %s117
      %s132 = sphi 0, %s118
      %s136 = sphi 0, %s136
      %s138 = sphi 0, %s136
      %s139 = sphi 0, %s138
      %s153 = sphi 0, %s139
      %s157 = sphi 0, %s157
      %s159 = sphi 0, %s157
      %s160 = sphi 0, %s159
      %s174 = sphi 0, %s160
      %s178 = sphi 0, %s178
      %s180 = sphi 0, %s178
      %s181 = sphi 0, %s180
      %s195 = sphi 0, %s181
      %s199 = sphi 0, %s199
      %s201 = sphi 0, %s199
      %s202 = sphi 0, %s201
      %s216 = sphi 0, %s202
      %s224 = sphi 0, %s226
      %s227 = sphi 0, %s224
      %s228 = sphi 0, %s227
      %s244 = sphi 0, %s228
      %s252 = sphi 0, %s254
      %s255 = sphi 0, %s252
      %s256 = sphi 0, %s255
      %s272 = sphi 0, %s256
      %s278 = sphi 0, %s280
      %s281 = sphi 0, %s278
      %s282 = sphi 0, %s281
      %s298 = sphi 0, %s282
      %s304 = sphi 0, %s306
      %s307 = sphi 0, %s304
      %s308 = sphi 0, %s307
      %s324 = sphi 0, %s308
      %s330 = sphi 0, %s332
      %s333 = sphi 0, %s330
      %s334 = sphi 0, %s333
      %s350 = sphi 0, %s334
    $region4: #{tpu_custom_call.1} parent=1 // loop_header_branch
      %28 = sbr.rel (%p26) target = $region8
    $region5: #{tpu_custom_call.1} parent=1 // loop_body
      %s30 = ssub.s32 %s25, 1
      %s31 = ssub.s32 %s25, 2
      %s38 = sadd.s32 1, %s33
      %p39 = scmp.ge.s32.totalorder %s38, 1
      %s40 = scalar_select %p39, 0, %s38
      %s41 = sadd.s32 1, %s32
      %s42 = scalar_select %p39, %s41, %s32
      %p43 = scmp.ge.s32.totalorder %s42, 2
      %s44 = scalar_select %p43, 0, %s42
      %s45 = ssub.s32 %s32, %s44
      %s46 = ssub.s32 %s33, %s40
      %s47 = sor.u32 %s45, %s46
      %p48 = scmp.eq.s32.totalorder %s47, 0
      %s50 = sadd.s32 %s49, 1
      %s51 = scalar_select %p48, %s49, %s50
      %p54 = pneg %p48
      %p55 = scmp.eq.s32.totalorder %s25, 1
      %p56 = por %p54, %p55
      %p57 = scmp.ne.s32.totalorder %s49, %s52
      %p58 = scmp.eq.s32.totalorder %s25, 0
      %p59 = por %p57, %p58
      %p60 = scmp.ne.s32.totalorder %s49, %s52
      %p61 = scmp.eq.s32.totalorder %s30, 1
      %p62 = por %p60, %p61
      %p63 = scmp.ne.s32.totalorder %s52, %s53
      %p64 = scmp.eq.s32.totalorder %s30, 0
      %p65 = por %p63, %p64
      %p66 = scmp.ne.s32.totalorder %s52, %s53
      %p67 = scmp.eq.s32.totalorder %s31, 1
      %p68 = por %p66, %p67
      %p70 = scmp.ne.s32.totalorder %s53, %s69
      %p71 = scmp.eq.s32.totalorder %s31, 0
      %p72 = por %p70, %p71
      %s74 = sadd.s32 %s73, 1
      %p77 = scmp.eq.s32.totalorder %s25, 1
      %p78 = scmp.ne.s32.totalorder %s73, %s75
      %p79 = scmp.eq.s32.totalorder %s25, 0
      %p80 = por %p78, %p79
      %p81 = scmp.ne.s32.totalorder %s73, %s75
      %p82 = scmp.eq.s32.totalorder %s30, 1
      %p83 = por %p81, %p82
      %p84 = scmp.ne.s32.totalorder %s75, %s76
      %p85 = scmp.eq.s32.totalorder %s30, 0
      %p86 = por %p84, %p85
      %p87 = scmp.ne.s32.totalorder %s75, %s76
      %p88 = scmp.eq.s32.totalorder %s31, 1
      %p89 = por %p87, %p88
      %p91 = scmp.ne.s32.totalorder %s76, %s90
      %p92 = scmp.eq.s32.totalorder %s31, 0
      %p93 = por %p91, %p92
      %s95 = sadd.s32 %s94, 1
      %p98 = scmp.eq.s32.totalorder %s25, 1
      %p99 = scmp.ne.s32.totalorder %s94, %s96
      %p100 = scmp.eq.s32.totalorder %s25, 0
      %p101 = por %p99, %p100
      %p102 = scmp.ne.s32.totalorder %s94, %s96
      %p103 = scmp.eq.s32.totalorder %s30, 1
      %p104 = por %p102, %p103
      %p105 = scmp.ne.s32.totalorder %s96, %s97
      %p106 = scmp.eq.s32.totalorder %s30, 0
      %p107 = por %p105, %p106
      %p108 = scmp.ne.s32.totalorder %s96, %s97
      %p109 = scmp.eq.s32.totalorder %s31, 1
      %p110 = por %p108, %p109
      %p112 = scmp.ne.s32.totalorder %s97, %s111
      %p113 = scmp.eq.s32.totalorder %s31, 0
      %p114 = por %p112, %p113
      %s116 = sadd.s32 %s115, 1
      %p119 = scmp.eq.s32.totalorder %s25, 1
      %p120 = scmp.ne.s32.totalorder %s115, %s117
      %p121 = scmp.eq.s32.totalorder %s25, 0
      %p122 = por %p120, %p121
      %p123 = scmp.ne.s32.totalorder %s115, %s117
      %p124 = scmp.eq.s32.totalorder %s30, 1
      %p125 = por %p123, %p124
      %p126 = scmp.ne.s32.totalorder %s117, %s118
      %p127 = scmp.eq.s32.totalorder %s30, 0
      %p128 = por %p126, %p127
      %p129 = scmp.ne.s32.totalorder %s117, %s118
      %p130 = scmp.eq.s32.totalorder %s31, 1
      %p131 = por %p129, %p130
      %p133 = scmp.ne.s32.totalorder %s118, %s132
      %p134 = scmp.eq.s32.totalorder %s31, 0
      %p135 = por %p133, %p134
      %s137 = sadd.s32 %s136, 1
      %p140 = scmp.eq.s32.totalorder %s25, 1
      %p141 = scmp.ne.s32.totalorder %s136, %s138
      %p142 = scmp.eq.s32.totalorder %s25, 0
      %p143 = por %p141, %p142
      %p144 = scmp.ne.s32.totalorder %s136, %s138
      %p145 = scmp.eq.s32.totalorder %s30, 1
      %p146 = por %p144, %p145
      %p147 = scmp.ne.s32.totalorder %s138, %s139
      %p148 = scmp.eq.s32.totalorder %s30, 0
      %p149 = por %p147, %p148
      %p150 = scmp.ne.s32.totalorder %s138, %s139
      %p151 = scmp.eq.s32.totalorder %s31, 1
      %p152 = por %p150, %p151
      %p154 = scmp.ne.s32.totalorder %s139, %s153
      %p155 = scmp.eq.s32.totalorder %s31, 0
      %p156 = por %p154, %p155
      %s158 = sadd.s32 %s157, 1
      %p161 = scmp.eq.s32.totalorder %s25, 1
      %p162 = scmp.ne.s32.totalorder %s157, %s159
      %p163 = scmp.eq.s32.totalorder %s25, 0
      %p164 = por %p162, %p163
      %p165 = scmp.ne.s32.totalorder %s157, %s159
      %p166 = scmp.eq.s32.totalorder %s30, 1
      %p167 = por %p165, %p166
      %p168 = scmp.ne.s32.totalorder %s159, %s160
      %p169 = scmp.eq.s32.totalorder %s30, 0
      %p170 = por %p168, %p169
      %p171 = scmp.ne.s32.totalorder %s159, %s160
      %p172 = scmp.eq.s32.totalorder %s31, 1
      %p173 = por %p171, %p172
      %p175 = scmp.ne.s32.totalorder %s160, %s174
      %p176 = scmp.eq.s32.totalorder %s31, 0
      %p177 = por %p175, %p176
      %s179 = sadd.s32 %s178, 1
      %p182 = scmp.eq.s32.totalorder %s25, 1
      %p183 = scmp.ne.s32.totalorder %s178, %s180
      %p184 = scmp.eq.s32.totalorder %s25, 0
      %p185 = por %p183, %p184
      %p186 = scmp.ne.s32.totalorder %s178, %s180
      %p187 = scmp.eq.s32.totalorder %s30, 1
      %p188 = por %p186, %p187
      %p189 = scmp.ne.s32.totalorder %s180, %s181
      %p190 = scmp.eq.s32.totalorder %s30, 0
      %p191 = por %p189, %p190
      %p192 = scmp.ne.s32.totalorder %s180, %s181
      %p193 = scmp.eq.s32.totalorder %s31, 1
      %p194 = por %p192, %p193
      %p196 = scmp.ne.s32.totalorder %s181, %s195
      %p197 = scmp.eq.s32.totalorder %s31, 0
      %p198 = por %p196, %p197
      %s200 = sadd.s32 %s199, 1
      %p203 = scmp.eq.s32.totalorder %s25, 1
      %p204 = scmp.ne.s32.totalorder %s199, %s201
      %p205 = scmp.eq.s32.totalorder %s25, 0
      %p206 = por %p204, %p205
      %p207 = scmp.ne.s32.totalorder %s199, %s201
      %p208 = scmp.eq.s32.totalorder %s30, 1
      %p209 = por %p207, %p208
      %p210 = scmp.ne.s32.totalorder %s201, %s202
      %p211 = scmp.eq.s32.totalorder %s30, 0
      %p212 = por %p210, %p211
      %p213 = scmp.ne.s32.totalorder %s201, %s202
      %p214 = scmp.eq.s32.totalorder %s31, 1
      %p215 = por %p213, %p214
      %p217 = scmp.ne.s32.totalorder %s202, %s216
      %p218 = scmp.eq.s32.totalorder %s31, 0
      %p219 = por %p217, %p218
      %s220 = ssub.s32 %s32, %s44
      %s221 = ssub.s32 %s33, %s40
      %s222 = sor.u32 %s220, %s221
      %p223 = scmp.eq.s32.totalorder %s222, 0
      %s225 = sadd.s32 %s224, 1
      %s226 = scalar_select %p223, %s224, %s225
      %p229 = pneg %p223
      %p230 = scmp.eq.s32.totalorder %s25, 1
      %p231 = por %p229, %p230
      %p232 = scmp.ne.s32.totalorder %s224, %s227
      %p233 = scmp.eq.s32.totalorder %s25, 0
      %p234 = por %p232, %p233
      %p235 = scmp.ne.s32.totalorder %s224, %s227
      %p236 = scmp.eq.s32.totalorder %s30, 1
      %p237 = por %p235, %p236
      %p238 = scmp.ne.s32.totalorder %s227, %s228
      %p239 = scmp.eq.s32.totalorder %s30, 0
      %p240 = por %p238, %p239
      %p241 = scmp.ne.s32.totalorder %s227, %s228
      %p242 = scmp.eq.s32.totalorder %s31, 1
      %p243 = por %p241, %p242
      %p245 = scmp.ne.s32.totalorder %s228, %s244
      %p246 = scmp.eq.s32.totalorder %s31, 0
      %p247 = por %p245, %p246
      %s248 = ssub.s32 %s32, %s44
      %s249 = ssub.s32 %s33, %s40
      %s250 = sor.u32 %s248, %s249
      %p251 = scmp.eq.s32.totalorder %s250, 0
      %s253 = sadd.s32 %s252, 1
      %s254 = scalar_select %p251, %s252, %s253
      %p257 = pneg %p251
      %p258 = scmp.eq.s32.totalorder %s25, 1
      %p259 = por %p257, %p258
      %p260 = scmp.ne.s32.totalorder %s252, %s255
      %p261 = scmp.eq.s32.totalorder %s25, 0
      %p262 = por %p260, %p261
      %p263 = scmp.ne.s32.totalorder %s252, %s255
      %p264 = scmp.eq.s32.totalorder %s30, 1
      %p265 = por %p263, %p264
      %p266 = scmp.ne.s32.totalorder %s255, %s256
      %p267 = scmp.eq.s32.totalorder %s30, 0
      %p268 = por %p266, %p267
      %p269 = scmp.ne.s32.totalorder %s255, %s256
      %p270 = scmp.eq.s32.totalorder %s31, 1
      %p271 = por %p269, %p270
      %p273 = scmp.ne.s32.totalorder %s256, %s272
      %p274 = scmp.eq.s32.totalorder %s31, 0
      %p275 = por %p273, %p274
      %s276 = ssub.s32 %s32, %s44
      %p277 = scmp.eq.s32.totalorder %s276, 0
      %s279 = sadd.s32 %s278, 1
      %s280 = scalar_select %p277, %s278, %s279
      %p283 = pneg %p277
      %p284 = scmp.eq.s32.totalorder %s25, 1
      %p285 = por %p283, %p284
      %p286 = scmp.ne.s32.totalorder %s278, %s281
      %p287 = scmp.eq.s32.totalorder %s25, 0
      %p288 = por %p286, %p287
      %p289 = scmp.ne.s32.totalorder %s278, %s281
      %p290 = scmp.eq.s32.totalorder %s30, 1
      %p291 = por %p289, %p290
      %p292 = scmp.ne.s32.totalorder %s281, %s282
      %p293 = scmp.eq.s32.totalorder %s30, 0
      %p294 = por %p292, %p293
      %p295 = scmp.ne.s32.totalorder %s281, %s282
      %p296 = scmp.eq.s32.totalorder %s31, 1
      %p297 = por %p295, %p296
      %p299 = scmp.ne.s32.totalorder %s282, %s298
      %p300 = scmp.eq.s32.totalorder %s31, 0
      %p301 = por %p299, %p300
      %s302 = ssub.s32 %s32, %s44
      %p303 = scmp.eq.s32.totalorder %s302, 0
      %s305 = sadd.s32 %s304, 1
      %s306 = scalar_select %p303, %s304, %s305
      %p309 = pneg %p303
      %p310 = scmp.eq.s32.totalorder %s25, 1
      %p311 = por %p309, %p310
      %p312 = scmp.ne.s32.totalorder %s304, %s307
      %p313 = scmp.eq.s32.totalorder %s25, 0
      %p314 = por %p312, %p313
      %p315 = scmp.ne.s32.totalorder %s304, %s307
      %p316 = scmp.eq.s32.totalorder %s30, 1
      %p317 = por %p315, %p316
      %p318 = scmp.ne.s32.totalorder %s307, %s308
      %p319 = scmp.eq.s32.totalorder %s30, 0
      %p320 = por %p318, %p319
      %p321 = scmp.ne.s32.totalorder %s307, %s308
      %p322 = scmp.eq.s32.totalorder %s31, 1
      %p323 = por %p321, %p322
      %p325 = scmp.ne.s32.totalorder %s308, %s324
      %p326 = scmp.eq.s32.totalorder %s31, 0
      %p327 = por %p325, %p326
      %s328 = ssub.s32 %s32, %s44
      %p329 = scmp.eq.s32.totalorder %s328, 0
      %s331 = sadd.s32 %s330, 1
      %s332 = scalar_select %p329, %s330, %s331
      %p335 = pneg %p329
      %p336 = scmp.eq.s32.totalorder %s25, 1
      %p337 = por %p335, %p336
      %p338 = scmp.ne.s32.totalorder %s330, %s333
      %p339 = scmp.eq.s32.totalorder %s25, 0
      %p340 = por %p338, %p339
      %p341 = scmp.ne.s32.totalorder %s330, %s333
      %p342 = scmp.eq.s32.totalorder %s30, 1
      %p343 = por %p341, %p342
      %p344 = scmp.ne.s32.totalorder %s333, %s334
      %p345 = scmp.eq.s32.totalorder %s30, 0
      %p346 = por %p344, %p345
      %p347 = scmp.ne.s32.totalorder %s333, %s334
      %p348 = scmp.eq.s32.totalorder %s31, 1
      %p349 = por %p347, %p348
      %p351 = scmp.ne.s32.totalorder %s334, %s350
      %p352 = scmp.eq.s32.totalorder %s31, 0
      %p353 = por %p351, %p352
      %p354 = scmp.le.s32.totalorder 1, %s25
      %p355 = scmp.lt.s32.totalorder %s25, 3
      %p356 = pnand %p354, %p355
      %p357 = pneg %p356
      // Predicated region
      $region9: #{tpu_custom_call.1} parent=5 // pred_check
        _
      $region10: #{tpu_custom_call.1} parent=5 // pred_check_branch
        %359 = sbr.rel (%p356) target = $region12
      $region11: #{tpu_custom_call.1} parent=5 // pred_region
        %s360 = ssub.s32 %s25, 1
        // Predicated region
        $region13: #{tpu_custom_call.1} parent=11 // pred_check
          %p361 = pneg %p86
        $region14: #{tpu_custom_call.1} parent=11 // pred_check_branch
          %363 = sbr.rel (%p361) target = $region16
        $region15: #{tpu_custom_call.1} parent=11 // pred_region
          _
        $region16: #{tpu_custom_call.1} parent=11 // pred_fallthru
          _
        // Predicated region
        $region17: #{tpu_custom_call.1} parent=11 // pred_check
          %p364 = pneg %p107
        $region18: #{tpu_custom_call.1} parent=11 // pred_check_branch
          %366 = sbr.rel (%p364) target = $region20
        $region19: #{tpu_custom_call.1} parent=11 // pred_region
          _
        $region20: #{tpu_custom_call.1} parent=11 // pred_fallthru
          _
        // Predicated region
        $region21: #{tpu_custom_call.1} parent=11 // pred_check
          %p367 = pneg %p128
        $region22: #{tpu_custom_call.1} parent=11 // pred_check_branch
          %369 = sbr.rel (%p367) target = $region24
        $region23: #{tpu_custom_call.1} parent=11 // pred_region
          _
        $region24: #{tpu_custom_call.1} parent=11 // pred_fallthru
          _
        // Predicated region
        $region25: #{tpu_custom_call.1} parent=11 // pred_check
          %p370 = pneg %p149
        $region26: #{tpu_custom_call.1} parent=11 // pred_check_branch
          %372 = sbr.rel (%p370) target = $region28
        $region27: #{tpu_custom_call.1} parent=11 // pred_region
          _
        $region28: #{tpu_custom_call.1} parent=11 // pred_fallthru
          _
        // Predicated region
        $region29: #{tpu_custom_call.1} parent=11 // pred_check
          %p373 = pneg %p170
        $region30: #{tpu_custom_call.1} parent=11 // pred_check_branch
          %375 = sbr.rel (%p373) target = $region32
        $region31: #{tpu_custom_call.1} parent=11 // pred_region
          _
        $region32: #{tpu_custom_call.1} parent=11 // pred_fallthru
          _
        // Predicated region
        $region33: #{tpu_custom_call.1} parent=11 // pred_check
          %p376 = pneg %p191
        $region34: #{tpu_custom_call.1} parent=11 // pred_check_branch
          %378 = sbr.rel (%p376) target = $region36
        $region35: #{tpu_custom_call.1} parent=11 // pred_region
          _
        $region36: #{tpu_custom_call.1} parent=11 // pred_fallthru
          _
        // Predicated region
        $region37: #{tpu_custom_call.1} parent=11 // pred_check
          %p379 = pneg %p212
        $region38: #{tpu_custom_call.1} parent=11 // pred_check_branch
          %381 = sbr.rel (%p379) target = $region40
        $region39: #{tpu_custom_call.1} parent=11 // pred_region
          _
        $region40: #{tpu_custom_call.1} parent=11 // pred_fallthru
          _
      $region12: #{tpu_custom_call.1} parent=5 // pred_fallthru
        _
      %p382 = scmp.lt.s32.totalorder %s25, 2
      // Predicated region
      $region41: #{tpu_custom_call.1} parent=5 // pred_check
        %p383 = pneg %p382
      $region42: #{tpu_custom_call.1} parent=5 // pred_check_branch
        %385 = sbr.rel (%p383) target = $region44
      $region43: #{tpu_custom_call.1} parent=5 // pred_region
        // Predicated region
        $region45: #{tpu_custom_call.1} parent=43 // pred_check
          %p386 = pneg %p59
        $region46: #{tpu_custom_call.1} parent=43 // pred_check_branch
          %388 = sbr.rel (%p386) target = $region48
        $region47: #{tpu_custom_call.1} parent=43 // pred_region
          %s389 = smul.u32 2, %s33
          %p390 = scmp.lt.s32.totalorder %s32, 1
          %s391 = scalar_select %p390, %s32, 1
          %p392 = scmp.lt.s32.totalorder %s389, 1
          %s393 = scalar_select %p392, %s389, 1
          %s394 = smul.addr %s391, 8
          %s395 = sadd.s32 %s393, %s394
          %s396 = smul.addr %s395, 8
          %s397 = scalar_lea.vmem %s0, %s396
          %s398 = smul.u32 2, %s33
        $region48: #{tpu_custom_call.1} parent=43 // pred_fallthru
          _
      $region44: #{tpu_custom_call.1} parent=5 // pred_fallthru
        _
      %p399 = scmp.le.s32.totalorder 1, %s25
      %p400 = scmp.lt.s32.totalorder %s25, 3
      %p401 = pnand %p399, %p400
      %p402 = pneg %p401
      // Predicated region
      $region49: #{tpu_custom_call.1} parent=5 // pred_check
        _
      $region50: #{tpu_custom_call.1} parent=5 // pred_check_branch
        %404 = sbr.rel (%p401) target = $region52
      $region51: #{tpu_custom_call.1} parent=5 // pred_region
        %s405 = ssub.s32 %s25, 1
        %s406 = smul.u32 2, %s35
        %p407 = scmp.lt.s32.totalorder %s34, 1
        %s408 = scalar_select %p407, %s34, 1
        %p409 = scmp.lt.s32.totalorder %s406, 1
        %s410 = scalar_select %p409, %s406, 1
        %s411 = smul.addr %s408, 8
        %s412 = sadd.s32 %s410, %s411
        %s413 = smul.addr %s412, 8
        %s414 = scalar_lea.vmem %s0, %s413
        %p415 = pneg %p65
        %p416 = pneg %p62
        %p417 = pneg %p86
        %p418 = pneg %p83
        %p419 = pneg %p107
        %p420 = pneg %p104
        %p421 = pneg %p128
        %p422 = pneg %p125
        %p423 = pneg %p149
        %p424 = pneg %p146
        %p425 = pneg %p170
        %p426 = pneg %p167
        %p427 = pneg %p191
        %p428 = pneg %p188
        %p429 = pneg %p212
        %p430 = pneg %p209
        %p431 = pneg %p240
        %p432 = pneg %p237
        %s433 = sand.u32 %s227, 1
        %s434 = scalar_lea.sflag [#allocation3], %s433
        %s435 = sand.u32 %s227, 1
        %s436 = smul.addr %s435, 64
        %s437 = scalar_lea.vmem [#allocation2], %s436
        %p438 = pneg %p268
        %p439 = pneg %p265
        %s440 = sand.u32 %s255, 1
        %s441 = scalar_lea.sflag [#allocation5], %s440
        %s442 = sand.u32 %s255, 1
        %s443 = smul.addr %s442, 2
        %s444 = scalar_lea.vmem [#allocation4], %s443
        %p445 = pneg %p294
        %p446 = pneg %p291
        %p447 = scmp.lt.s32.totalorder %s34, 1
        %s448 = scalar_select %p447, %s34, 1
        %s449 = smul.addr %s448, 32
        %s450 = smul.addr %s449, 8
        %s451 = scalar_lea.vmem %s10, %s450
        %p452 = pneg %p320
        %p453 = pneg %p317
        %p454 = scmp.lt.s32.totalorder %s34, 1
        %s455 = scalar_select %p454, %s34, 1
        %s456 = scalar_lea.vmem %s11, %s455
        %p457 = pneg %p346
        %p458 = pneg %p343
        %p459 = scmp.lt.s32.totalorder %s34, 1
        %s460 = scalar_select %p459, %s34, 1
        %s461 = scalar_lea.vmem %s12, %s460
        %s462 = smul.u32 2, %s35
        %p463 = scmp.lt.s32.totalorder %s34, 1
        %s464 = scalar_select %p463, %s34, 1
        %p465 = scmp.lt.s32.totalorder %s462, 1
        %s466 = scalar_select %p465, %s462, 1
        %s467 = smul.addr %s464, 8
        %s468 = sadd.s32 %s466, %s467
        %s469 = smul.addr %s468, 8
        %s470 = scalar_lea.vmem %s0, %s469
        %s471 = smul.u32 2, %s35
        %s472 = smul.u32 2, %s35
        %s473 = smul.u32 2, %s35
        %p474 = scmp.lt.s32.totalorder %s34, 1
        %s475 = scalar_select %p474, %s34, 1
        %s476 = smul.addr %s475, 32
        %s477 = smul.addr %s476, 8
        %s478 = scalar_lea.vmem %s10, %s477
        %p479 = scmp.lt.s32.totalorder %s34, 1
        %s480 = scalar_select %p479, %s34, 1
        %s481 = scalar_lea.vmem %s11, %s480
        %p482 = scmp.lt.s32.totalorder %s34, 1
        %s483 = scalar_select %p482, %s34, 1
        %s484 = scalar_lea.vmem %s12, %s483
        %p485 = scmp.eq.s32.totalorder %s35, 0
        // Predicated region
        $region53: #{tpu_custom_call.1} parent=51 // pred_check
          %p486 = pneg %p485
        $region54: #{tpu_custom_call.1} parent=51 // pred_check_branch
          %488 = sbr.rel (%p486) target = $region56
        $region55: #{tpu_custom_call.1} parent=51 // pred_region
          %vm489 = vcmask 7168
          %490 = vst.msk [vmem:[%s478] sm:$0xff] %vm489, 0.0
          %491 = vst.msk [vmem:[%s478 + $0x8] sm:$0xff] %vm489, 0.0
          %492 = vst.msk [vmem:[%s478 + $0x10] sm:$0xff] %vm489, 0.0
          %493 = vst.msk [vmem:[%s478 + $0x18] sm:$0xff] %vm489, 0.0
          %494 = vst.msk [vmem:[%s478 + $0x20] sm:$0xff] %vm489, 0.0
          %495 = vst.msk [vmem:[%s478 + $0x28] sm:$0xff] %vm489, 0.0
          %496 = vst.msk [vmem:[%s478 + $0x30] sm:$0xff] %vm489, 0.0
          %497 = vst.msk [vmem:[%s478 + $0x38] sm:$0xff] %vm489, 0.0
          %498 = vst.msk [vmem:[%s478 + $0x40] sm:$0xff] %vm489, 0.0
          %499 = vst.msk [vmem:[%s478 + $0x48] sm:$0xff] %vm489, 0.0
          %500 = vst.msk [vmem:[%s478 + $0x50] sm:$0xff] %vm489, 0.0
          %501 = vst.msk [vmem:[%s478 + $0x58] sm:$0xff] %vm489, 0.0
          %502 = vst.msk [vmem:[%s478 + $0x60] sm:$0xff] %vm489, 0.0
          %503 = vst.msk [vmem:[%s478 + $0x68] sm:$0xff] %vm489, 0.0
          %504 = vst.msk [vmem:[%s478 + $0x70] sm:$0xff] %vm489, 0.0
          %505 = vst.msk [vmem:[%s478 + $0x78] sm:$0xff] %vm489, 0.0
          %506 = vst.msk [vmem:[%s478 + $0x80] sm:$0xff] %vm489, 0.0
          %507 = vst.msk [vmem:[%s478 + $0x88] sm:$0xff] %vm489, 0.0
          %508 = vst.msk [vmem:[%s478 + $0x90] sm:$0xff] %vm489, 0.0
          %509 = vst.msk [vmem:[%s478 + $0x98] sm:$0xff] %vm489, 0.0
          %510 = vst.msk [vmem:[%s478 + $0xa0] sm:$0xff] %vm489, 0.0
          %511 = vst.msk [vmem:[%s478 + $0xa8] sm:$0xff] %vm489, 0.0
          %512 = vst.msk [vmem:[%s478 + $0xb0] sm:$0xff] %vm489, 0.0
          %513 = vst.msk [vmem:[%s478 + $0xb8] sm:$0xff] %vm489, 0.0
          %514 = vst.msk [vmem:[%s478 + $0xc0] sm:$0xff] %vm489, 0.0
          %515 = vst.msk [vmem:[%s478 + $0xc8] sm:$0xff] %vm489, 0.0
          %516 = vst.msk [vmem:[%s478 + $0xd0] sm:$0xff] %vm489, 0.0
          %517 = vst.msk [vmem:[%s478 + $0xd8] sm:$0xff] %vm489, 0.0
          %518 = vst.msk [vmem:[%s478 + $0xe0] sm:$0xff] %vm489, 0.0
          %519 = vst.msk [vmem:[%s478 + $0xe8] sm:$0xff] %vm489, 0.0
          %520 = vst.msk [vmem:[%s478 + $0xf0] sm:$0xff] %vm489, 0.0
          %521 = vst.msk [vmem:[%s478 + $0xf8] sm:$0xff] %vm489, 0.0
          %vm522 = vcmask 0
          %523 = vst.msk [vmem:[%s481] sm:$0x1] %vm522, 0.0
          %524 = vst.msk [vmem:[%s484] sm:$0x1] %vm522, 0.0
        $region56: #{tpu_custom_call.1} parent=51 // pred_fallthru
          _
        %v525 = vld [vmem:[%s470] sm:$0xff]
        %v526 = vld [vmem:[%s470 + $0x8] sm:$0xff]
        %v527 = vld [vmem:[%s470 + $0x10] sm:$0xff]
        %v528 = vld [vmem:[%s470 + $0x18] sm:$0xff]
        %v529 = vld [vmem:[%s470 + $0x20] sm:$0xff]
        %v530 = vld [vmem:[%s470 + $0x28] sm:$0xff]
        %v531 = vld [vmem:[%s470 + $0x30] sm:$0xff]
        %v532 = vld [vmem:[%s470 + $0x38] sm:$0xff]
        %v533 = vld [vmem:[%s1] sm:$0xff]
        %v534 = vld [vmem:[%s2] sm:$0xff]
        %536 = vset.pattern.permute.xlu0 0
        %537 = vperm.xlu0 %536, %v534
        %v538 = vpop.permute.xlu0 %537
        %vm540 = vcmask 261120
        %v542 = vsel %vm540, %v533, 0
        %544 = vmatprep.subr.mxu0 0.0
        %545 = vmatpush1.msra.mxu0 0.0
        %546 = vmatprep.subr.mxu0 0.0
        %547 = vmatpush1.msra.mxu0 0.0
        %548 = vmatprep.subr.mxu0 0.0
        %549 = vmatpush1.msra.mxu0 0.0
        %550 = vmatprep.subr.mxu0 0.0
        %551 = vmatpush1.msra.mxu0 0.0
        %552 = vmatprep.subr.mxu0 0.0
        %553 = vmatpush1.msra.mxu0 0.0
        %554 = vmatprep.subr.mxu0 0.0
        %555 = vmatpush1.msra.mxu0 0.0
        %556 = vmatprep.subr.mxu0 0.0
        %557 = vmatpush1.msra.mxu0 0.0
        %558 = vmatprep.subr.mxu0 0.0
        %559 = vmatpush1.msra.mxu0 0.0
        %560 = vmatprep.subr.mxu0 0.0
        %561 = vmatpush1.msra.mxu0 0.0
        %562 = vmatprep.subr.mxu0 0.0
        %563 = vmatpush1.msra.mxu0 0.0
        %564 = vmatprep.subr.mxu0 0.0
        %565 = vmatpush1.msra.mxu0 0.0
        %566 = vmatprep.subr.mxu0 0.0
        %567 = vmatpush1.msra.mxu0 0.0
        %568 = vmatprep.subr.mxu0 %v532
        %569 = vmatpush1.msra.mxu0 %v531
        %570 = vmatprep.subr.mxu0 %v530
        %571 = vmatpush1.msra.mxu0 %v529
        %572 = vmatprep.subr.mxu0 %v528
        %573 = vmatpush1.msra.mxu0 %v527
        %574 = vmatprep.subr.mxu0 %v526
        %575 = vmatpush1.msra.mxu0 %v525
        %576 = vmatprep.subr.mxu0 0.0
        %577 = vmatpush2.msra.mxu0 0.0
        %578 = vmatprep.subr.mxu0 0.0
        %579 = vmatpush2.msra.mxu0 0.0
        %580 = vmatprep.subr.mxu0 0.0
        %581 = vmatpush2.msra.mxu0 0.0
        %582 = vmatprep.subr.mxu0 0.0
        %583 = vmatpush2.msra.mxu0 0.0
        %584 = vmatprep.subr.mxu0 0.0
        %585 = vmatpush2.msra.mxu0 0.0
        %586 = vmatprep.subr.mxu0 0.0
        %587 = vmatpush2.msra.mxu0 0.0
        %588 = vmatprep.subr.mxu0 0.0
        %589 = vmatpush2.msra.mxu0 0.0
        %590 = vmatprep.subr.mxu0 0.0
        %591 = vmatpush2.msra.mxu0 0.0
        %592 = vmatprep.subr.mxu0 0.0
        %593 = vmatpush2.msra.mxu0 0.0
        %594 = vmatprep.subr.mxu0 0.0
        %595 = vmatpush2.msra.mxu0 0.0
        %596 = vmatprep.subr.mxu0 0.0
        %597 = vmatpush2.msra.mxu0 0.0
        %598 = vmatprep.subr.mxu0 0.0
        %599 = vmatpush2.msra.mxu0 0.0
        %600 = vmatprep.subr.mxu0 0.0
        %601 = vmatpush2.msra.mxu0 0.0
        %602 = vmatprep.subr.mxu0 0.0
        %603 = vmatpush2.msra.mxu0 0.0
        %604 = vmatprep.subr.mxu0 0.0
        %605 = vmatpush2.msra.mxu0 0.0
        %606 = vmatprep.subr.mxu0 0.0
        %607 = vmatpush2.msra.mxu0 0.0
        %608 = vmatprep.mubr.f32.mxu0 0.0
        %609 = vmatmul.mubr.f32.gmra.mxu0 %v542
        %v610 = vpop.f32.mrf.mxu0
        %v611 = vadd.f32 %v538, %v610
        %v612 = vpop.f32.mrf.mxu0
        %v613 = vadd.f32 %v538, %v612
        %614 = vdwg.mxu0
        %vm615 = vcmp.gt.f32.partialorder %v611, 0.0
        %vm616 = vcmp.gt.f32.partialorder %v613, 0.0
        %v617 = vsel %vm615, 1.0, -1.0
        %v618 = vsel %vm616, 1.0, -1.0
        %v619 = vsel %vm615, 1, 0
        %v620 = vsel %vm616, 1, 0
        %v621 = vcvt.s32.f32 %v619
        %v622 = vcvt.s32.f32 %v620
        %v623 = vld [vmem:[%s5] sm:$0xff]
        %625 = vset.pattern.permute.xlu0 0
        %626 = vperm.xlu0 %625, %v623
        %v627 = vpop.permute.xlu0 %626
        %v629 = vmul.f32 %v621, %v627
        %v630 = vmul.f32 %v622, %v627
        %v631 = vrot.slane %v629, 4
        %v632 = vadd.f32 %v629, %v631
        %v633 = vrot.slane %v632, 2
        %v634 = vadd.f32 %v632, %v633
        %v635 = vrot.slane %v634, 1
        %v636 = vadd.f32 %v634, %v635
        %v637 = vrot.slane %v630, 4
        %v638 = vadd.f32 %v630, %v637
        %v639 = vrot.slane %v638, 2
        %v640 = vadd.f32 %v638, %v639
        %v641 = vrot.slane %v640, 1
        %v642 = vadd.f32 %v640, %v641
        %v643 = vcvt.f32.s32.to.zero.pseudo %v636
        %v644 = vcvt.f32.s32.to.zero.pseudo %v642
        %v645 = vcombine.low %v643, %v644
        %v647 = vunpack.c.l.s4 1966171168
        %v648 = vunpack.c.0.s8 %v647
        %v649 = vlaneseq
        %v650 = vshrl.u32 %v649, 7
        %v651 = vsub.s32 %v648, %v650
        %v652 = vrot.slane %v645, %v651
        %v654 = vunpack.c.l.s4 1966171168
        %v655 = vunpack.c.0.s8 %v654
        %v656 = vlaneseq
        %v657 = vshrl.u32 %v656, 7
        %v658 = vsub.s32 %v655, %v657
        %v659 = vrot.slane %v652, %v658
        %v660 = vlaneseq
        %vm661 = vcmp.ge.s32.totalorder %v660, 0
        %vm662 = vcmp.lt.s32.totalorder %v660, 256
        %vm663 = vmand %vm661, %vm662
        %664 = vst.msk [vmem:[%s444] sm:$0x3] %vm663, %v659
        %v665 = vld [vmem:[%s6] sm:$0xff]
        %v666 = vld [vmem:[%s6 + $0x8] sm:$0xff]
        %v667 = vld [vmem:[%s6 + $0x10] sm:$0xff]
        %v668 = vld [vmem:[%s6 + $0x18] sm:$0xff]
        %v669 = vld [vmem:[%s7] sm:$0xff]
        %v670 = vld [vmem:[%s7 + $0x8] sm:$0xff]
        %v671 = vld [vmem:[%s7 + $0x10] sm:$0xff]
        %v672 = vld [vmem:[%s7 + $0x18] sm:$0xff]
        %674 = vset.pattern.permute.xlu0 0
        %675 = vperm.xlu0 %674, %v669
        %v676 = vpop.permute.xlu0 %675
        %679 = vset.pattern.permute.xlu0 0
        %680 = vperm.xlu0 %679, %v670
        %v681 = vpop.permute.xlu0 %680
        %684 = vset.pattern.permute.xlu0 0
        %685 = vperm.xlu0 %684, %v671
        %v686 = vpop.permute.xlu0 %685
        %689 = vset.pattern.permute.xlu0 0
        %690 = vperm.xlu0 %689, %v672
        %v691 = vpop.permute.xlu0 %690
        %vm693 = vcmask 64512
        %v695 = vsel %vm693, %v665, 0
        %v698 = vsel %vm693, %v666, 0
        %v701 = vsel %vm693, %v667, 0
        %v704 = vsel %vm693, %v668, 0
        %706 = vmatprep.subr.mxu0 0.0
        %707 = vmatpush1.msra.mxu0 0.0
        %708 = vmatprep.subr.mxu0 0.0
        %709 = vmatpush1.msra.mxu0 0.0
        %710 = vmatprep.subr.mxu0 0.0
        %711 = vmatpush1.msra.mxu0 0.0
        %712 = vmatprep.subr.mxu0 0.0
        %713 = vmatpush1.msra.mxu0 0.0
        %714 = vmatprep.subr.mxu0 0.0
        %715 = vmatpush1.msra.mxu0 0.0
        %716 = vmatprep.subr.mxu0 0.0
        %717 = vmatpush1.msra.mxu0 0.0
        %718 = vmatprep.subr.mxu0 0.0
        %719 = vmatpush1.msra.mxu0 0.0
        %720 = vmatprep.subr.mxu0 0.0
        %721 = vmatpush1.msra.mxu0 0.0
        %722 = vmatprep.subr.mxu0 0.0
        %723 = vmatpush1.msra.mxu0 0.0
        %724 = vmatprep.subr.mxu0 0.0
        %725 = vmatpush1.msra.mxu0 0.0
        %726 = vmatprep.subr.mxu0 0.0
        %727 = vmatpush1.msra.mxu0 0.0
        %728 = vmatprep.subr.mxu0 0.0
        %729 = vmatpush1.msra.mxu0 0.0
        %730 = vmatprep.subr.mxu0 0.0
        %731 = vmatpush1.msra.mxu0 0.0
        %732 = vmatprep.subr.mxu0 0.0
        %733 = vmatpush1.msra.mxu0 0.0
        %734 = vmatprep.subr.mxu0 0.0
        %735 = vmatpush1.msra.mxu0 0.0
        %736 = vmatprep.subr.mxu0 %v618
        %737 = vmatpush1.msra.mxu0 %v617
        %738 = vmatprep.subr.mxu0 0.0
        %739 = vmatpush2.msra.mxu0 0.0
        %740 = vmatprep.subr.mxu0 0.0
        %741 = vmatpush2.msra.mxu0 0.0
        %742 = vmatprep.subr.mxu0 0.0
        %743 = vmatpush2.msra.mxu0 0.0
        %744 = vmatprep.subr.mxu0 0.0
        %745 = vmatpush2.msra.mxu0 0.0
        %746 = vmatprep.subr.mxu0 0.0
        %747 = vmatpush2.msra.mxu0 0.0
        %748 = vmatprep.subr.mxu0 0.0
        %749 = vmatpush2.msra.mxu0 0.0
        %750 = vmatprep.subr.mxu0 0.0
        %751 = vmatpush2.msra.mxu0 0.0
        %752 = vmatprep.subr.mxu0 0.0
        %753 = vmatpush2.msra.mxu0 0.0
        %754 = vmatprep.subr.mxu0 0.0
        %755 = vmatpush2.msra.mxu0 0.0
        %756 = vmatprep.subr.mxu0 0.0
        %757 = vmatpush2.msra.mxu0 0.0
        %758 = vmatprep.subr.mxu0 0.0
        %759 = vmatpush2.msra.mxu0 0.0
        %760 = vmatprep.subr.mxu0 0.0
        %761 = vmatpush2.msra.mxu0 0.0
        %762 = vmatprep.subr.mxu0 0.0
        %763 = vmatpush2.msra.mxu0 0.0
        %764 = vmatprep.subr.mxu0 0.0
        %765 = vmatpush2.msra.mxu0 0.0
        %766 = vmatprep.subr.mxu0 0.0
        %767 = vmatpush2.msra.mxu0 0.0
        %768 = vmatprep.subr.mxu0 0.0
        %769 = vmatpush2.msra.mxu0 0.0
        %770 = vmatprep.mubr.f32.mxu0 0.0
        %771 = vmatmul.mubr.f32.gmra.mxu0 %v695
        %v772 = vpop.f32.mrf.mxu0
        %v773 = vadd.f32 %v676, %v772
        %v774 = vpop.f32.mrf.mxu0
        %v775 = vadd.f32 %v676, %v774
        %776 = vmatprep.mubr.f32.mxu0 0.0
        %777 = vmatmul.mubr.f32.gmra.mxu0 %v698
        %v778 = vpop.f32.mrf.mxu0
        %v779 = vadd.f32 %v681, %v778
        %v780 = vpop.f32.mrf.mxu0
        %v781 = vadd.f32 %v681, %v780
        %782 = vmatprep.mubr.f32.mxu0 0.0
        %783 = vmatmul.mubr.f32.gmra.mxu0 %v701
        %v784 = vpop.f32.mrf.mxu0
        %v785 = vadd.f32 %v686, %v784
        %v786 = vpop.f32.mrf.mxu0
        %v787 = vadd.f32 %v686, %v786
        %788 = vmatprep.mubr.f32.mxu0 0.0
        %789 = vmatmul.mubr.f32.gmra.mxu0 %v704
        %v790 = vpop.f32.mrf.mxu0
        %v791 = vadd.f32 %v691, %v790
        %v792 = vpop.f32.mrf.mxu0
        %v793 = vadd.f32 %v691, %v792
        %794 = vdwg.mxu0
        %795 = vst [vmem:[%s437] sm:$0xff] %v773
        %796 = vst [vmem:[%s437 + $0x8] sm:$0xff] %v775
        %797 = vst [vmem:[%s437 + $0x10] sm:$0xff] %v779
        %798 = vst [vmem:[%s437 + $0x18] sm:$0xff] %v781
        %799 = vst [vmem:[%s437 + $0x20] sm:$0xff] %v785
        %800 = vst [vmem:[%s437 + $0x28] sm:$0xff] %v787
        %801 = vst [vmem:[%s437 + $0x30] sm:$0xff] %v791
        %802 = vst [vmem:[%s437 + $0x38] sm:$0xff] %v793
        %v803 = vld [vmem:[%s3] sm:$0xff]
        %v804 = vld [vmem:[%s3 + $0x8] sm:$0xff]
        %v805 = vld [vmem:[%s3 + $0x10] sm:$0xff]
        %v806 = vld [vmem:[%s3 + $0x18] sm:$0xff]
        %v807 = vld [vmem:[%s3 + $0x20] sm:$0xff]
        %v808 = vld [vmem:[%s3 + $0x28] sm:$0xff]
        %v809 = vld [vmem:[%s3 + $0x30] sm:$0xff]
        %v810 = vld [vmem:[%s3 + $0x38] sm:$0xff]
        %v811 = vld [vmem:[%s3 + $0x40] sm:$0xff]
        %v812 = vld [vmem:[%s3 + $0x48] sm:$0xff]
        %v813 = vld [vmem:[%s3 + $0x50] sm:$0xff]
        %v814 = vld [vmem:[%s3 + $0x58] sm:$0xff]
        %v815 = vld [vmem:[%s3 + $0x60] sm:$0xff]
        %v816 = vld [vmem:[%s3 + $0x68] sm:$0xff]
        %v817 = vld [vmem:[%s3 + $0x70] sm:$0xff]
        %v818 = vld [vmem:[%s3 + $0x78] sm:$0xff]
        %v819 = vld [vmem:[%s3 + $0x80] sm:$0xff]
        %v820 = vld [vmem:[%s3 + $0x88] sm:$0xff]
        %v821 = vld [vmem:[%s3 + $0x90] sm:$0xff]
        %v822 = vld [vmem:[%s3 + $0x98] sm:$0xff]
        %v823 = vld [vmem:[%s3 + $0xa0] sm:$0xff]
        %v824 = vld [vmem:[%s3 + $0xa8] sm:$0xff]
        %v825 = vld [vmem:[%s3 + $0xb0] sm:$0xff]
        %v826 = vld [vmem:[%s3 + $0xb8] sm:$0xff]
        %v827 = vld [vmem:[%s3 + $0xc0] sm:$0xff]
        %v828 = vld [vmem:[%s3 + $0xc8] sm:$0xff]
        %v829 = vld [vmem:[%s3 + $0xd0] sm:$0xff]
        %v830 = vld [vmem:[%s3 + $0xd8] sm:$0xff]
        %v831 = vld [vmem:[%s3 + $0xe0] sm:$0xff]
        %v832 = vld [vmem:[%s3 + $0xe8] sm:$0xff]
        %v833 = vld [vmem:[%s3 + $0xf0] sm:$0xff]
        %v834 = vld [vmem:[%s3 + $0xf8] sm:$0xff]
        %v835 = vld [vmem:[%s4] sm:$0xff]
        %v836 = vld [vmem:[%s4 + $0x8] sm:$0xff]
        %v837 = vld [vmem:[%s4 + $0x10] sm:$0xff]
        %v838 = vld [vmem:[%s4 + $0x18] sm:$0xff]
        %v839 = vld [vmem:[%s4 + $0x20] sm:$0xff]
        %v840 = vld [vmem:[%s4 + $0x28] sm:$0xff]
        %v841 = vld [vmem:[%s4 + $0x30] sm:$0xff]
        %v842 = vld [vmem:[%s4 + $0x38] sm:$0xff]
        %v843 = vld [vmem:[%s4 + $0x40] sm:$0xff]
        %v844 = vld [vmem:[%s4 + $0x48] sm:$0xff]
        %v845 = vld [vmem:[%s4 + $0x50] sm:$0xff]
        %v846 = vld [vmem:[%s4 + $0x58] sm:$0xff]
        %v847 = vld [vmem:[%s4 + $0x60] sm:$0xff]
        %v848 = vld [vmem:[%s4 + $0x68] sm:$0xff]
        %v849 = vld [vmem:[%s4 + $0x70] sm:$0xff]
        %v850 = vld [vmem:[%s4 + $0x78] sm:$0xff]
        %v851 = vld [vmem:[%s4 + $0x80] sm:$0xff]
        %v852 = vld [vmem:[%s4 + $0x88] sm:$0xff]
        %v853 = vld [vmem:[%s4 + $0x90] sm:$0xff]
        %v854 = vld [vmem:[%s4 + $0x98] sm:$0xff]
        %v855 = vld [vmem:[%s4 + $0xa0] sm:$0xff]
        %v856 = vld [vmem:[%s4 + $0xa8] sm:$0xff]
        %v857 = vld [vmem:[%s4 + $0xb0] sm:$0xff]
        %v858 = vld [vmem:[%s4 + $0xb8] sm:$0xff]
        %v859 = vld [vmem:[%s4 + $0xc0] sm:$0xff]
        %v860 = vld [vmem:[%s4 + $0xc8] sm:$0xff]
        %v861 = vld [vmem:[%s4 + $0xd0] sm:$0xff]
        %v862 = vld [vmem:[%s4 + $0xd8] sm:$0xff]
        %v863 = vld [vmem:[%s4 + $0xe0] sm:$0xff]
        %v864 = vld [vmem:[%s4 + $0xe8] sm:$0xff]
        %v865 = vld [vmem:[%s4 + $0xf0] sm:$0xff]
        %v866 = vld [vmem:[%s4 + $0xf8] sm:$0xff]
        %868 = vset.pattern.permute.xlu0 0
        %869 = vperm.xlu0 %868, %v835
        %v870 = vpop.permute.xlu0 %869
        %873 = vset.pattern.permute.xlu0 0
        %874 = vperm.xlu0 %873, %v836
        %v875 = vpop.permute.xlu0 %874
        %878 = vset.pattern.permute.xlu0 0
        %879 = vperm.xlu0 %878, %v837
        %v880 = vpop.permute.xlu0 %879
        %883 = vset.pattern.permute.xlu0 0
        %884 = vperm.xlu0 %883, %v838
        %v885 = vpop.permute.xlu0 %884
        %888 = vset.pattern.permute.xlu0 0
        %889 = vperm.xlu0 %888, %v839
        %v890 = vpop.permute.xlu0 %889
        %893 = vset.pattern.permute.xlu0 0
        %894 = vperm.xlu0 %893, %v840
        %v895 = vpop.permute.xlu0 %894
        %898 = vset.pattern.permute.xlu0 0
        %899 = vperm.xlu0 %898, %v841
        %v900 = vpop.permute.xlu0 %899
        %903 = vset.pattern.permute.xlu0 0
        %904 = vperm.xlu0 %903, %v842
        %v905 = vpop.permute.xlu0 %904
        %908 = vset.pattern.permute.xlu0 0
        %909 = vperm.xlu0 %908, %v843
        %v910 = vpop.permute.xlu0 %909
        %913 = vset.pattern.permute.xlu0 0
        %914 = vperm.xlu0 %913, %v844
        %v915 = vpop.permute.xlu0 %914
        %918 = vset.pattern.permute.xlu0 0
        %919 = vperm.xlu0 %918, %v845
        %v920 = vpop.permute.xlu0 %919
        %923 = vset.pattern.permute.xlu0 0
        %924 = vperm.xlu0 %923, %v846
        %v925 = vpop.permute.xlu0 %924
        %928 = vset.pattern.permute.xlu0 0
        %929 = vperm.xlu0 %928, %v847
        %v930 = vpop.permute.xlu0 %929
        %933 = vset.pattern.permute.xlu0 0
        %934 = vperm.xlu0 %933, %v848
        %v935 = vpop.permute.xlu0 %934
        %938 = vset.pattern.permute.xlu0 0
        %939 = vperm.xlu0 %938, %v849
        %v940 = vpop.permute.xlu0 %939
        %943 = vset.pattern.permute.xlu0 0
        %944 = vperm.xlu0 %943, %v850
        %v945 = vpop.permute.xlu0 %944
        %948 = vset.pattern.permute.xlu0 0
        %949 = vperm.xlu0 %948, %v851
        %v950 = vpop.permute.xlu0 %949
        %953 = vset.pattern.permute.xlu0 0
        %954 = vperm.xlu0 %953, %v852
        %v955 = vpop.permute.xlu0 %954
        %958 = vset.pattern.permute.xlu0 0
        %959 = vperm.xlu0 %958, %v853
        %v960 = vpop.permute.xlu0 %959
        %963 = vset.pattern.permute.xlu0 0
        %964 = vperm.xlu0 %963, %v854
        %v965 = vpop.permute.xlu0 %964
        %968 = vset.pattern.permute.xlu0 0
        %969 = vperm.xlu0 %968, %v855
        %v970 = vpop.permute.xlu0 %969
        %973 = vset.pattern.permute.xlu0 0
        %974 = vperm.xlu0 %973, %v856
        %v975 = vpop.permute.xlu0 %974
        %978 = vset.pattern.permute.xlu0 0
        %979 = vperm.xlu0 %978, %v857
        %v980 = vpop.permute.xlu0 %979
        %983 = vset.pattern.permute.xlu0 0
        %984 = vperm.xlu0 %983, %v858
        %v985 = vpop.permute.xlu0 %984
        %988 = vset.pattern.permute.xlu0 0
        %989 = vperm.xlu0 %988, %v859
        %v990 = vpop.permute.xlu0 %989
        %993 = vset.pattern.permute.xlu0 0
        %994 = vperm.xlu0 %993, %v860
        %v995 = vpop.permute.xlu0 %994
        %998 = vset.pattern.permute.xlu0 0
        %999 = vperm.xlu0 %998, %v861
        %v1000 = vpop.permute.xlu0 %999
        %1003 = vset.pattern.permute.xlu0 0
        %1004 = vperm.xlu0 %1003, %v862
        %v1005 = vpop.permute.xlu0 %1004
        %1008 = vset.pattern.permute.xlu0 0
        %1009 = vperm.xlu0 %1008, %v863
        %v1010 = vpop.permute.xlu0 %1009
        %1013 = vset.pattern.permute.xlu0 0
        %1014 = vperm.xlu0 %1013, %v864
        %v1015 = vpop.permute.xlu0 %1014
        %1018 = vset.pattern.permute.xlu0 0
        %1019 = vperm.xlu0 %1018, %v865
        %v1020 = vpop.permute.xlu0 %1019
        %1023 = vset.pattern.permute.xlu0 0
        %1024 = vperm.xlu0 %1023, %v866
        %v1025 = vpop.permute.xlu0 %1024
        %v1028 = vsel %vm540, %v803, 0
        %v1031 = vsel %vm540, %v804, 0
        %v1034 = vsel %vm540, %v805, 0
        %v1037 = vsel %vm540, %v806, 0
        %v1040 = vsel %vm540, %v807, 0
        %v1043 = vsel %vm540, %v808, 0
        %v1046 = vsel %vm540, %v809, 0
        %v1049 = vsel %vm540, %v810, 0
        %v1052 = vsel %vm540, %v811, 0
        %v1055 = vsel %vm540, %v812, 0
        %v1058 = vsel %vm540, %v813, 0
        %v1061 = vsel %vm540, %v814, 0
        %v1064 = vsel %vm540, %v815, 0
        %v1067 = vsel %vm540, %v816, 0
        %v1070 = vsel %vm540, %v817, 0
        %v1073 = vsel %vm540, %v818, 0
        %v1076 = vsel %vm540, %v819, 0
        %v1079 = vsel %vm540, %v820, 0
        %v1082 = vsel %vm540, %v821, 0
        %v1085 = vsel %vm540, %v822, 0
        %v1088 = vsel %vm540, %v823, 0
        %v1091 = vsel %vm540, %v824, 0
        %v1094 = vsel %vm540, %v825, 0
        %v1097 = vsel %vm540, %v826, 0
        %v1100 = vsel %vm540, %v827, 0
        %v1103 = vsel %vm540, %v828, 0
        %v1106 = vsel %vm540, %v829, 0
        %v1109 = vsel %vm540, %v830, 0
        %v1112 = vsel %vm540, %v831, 0
        %v1115 = vsel %vm540, %v832, 0
        %v1118 = vsel %vm540, %v833, 0
        %v1121 = vsel %vm540, %v834, 0
        %1123 = vmatprep.subr.mxu0 0.0
        %1124 = vmatpush1.msra.mxu0 0.0
        %1125 = vmatprep.subr.mxu0 0.0
        %1126 = vmatpush1.msra.mxu0 0.0
        %1127 = vmatprep.subr.mxu0 0.0
        %1128 = vmatpush1.msra.mxu0 0.0
        %1129 = vmatprep.subr.mxu0 0.0
        %1130 = vmatpush1.msra.mxu0 0.0
        %1131 = vmatprep.subr.mxu0 0.0
        %1132 = vmatpush1.msra.mxu0 0.0
        %1133 = vmatprep.subr.mxu0 0.0
        %1134 = vmatpush1.msra.mxu0 0.0
        %1135 = vmatprep.subr.mxu0 0.0
        %1136 = vmatpush1.msra.mxu0 0.0
        %1137 = vmatprep.subr.mxu0 0.0
        %1138 = vmatpush1.msra.mxu0 0.0
        %1139 = vmatprep.subr.mxu0 0.0
        %1140 = vmatpush1.msra.mxu0 0.0
        %1141 = vmatprep.subr.mxu0 0.0
        %1142 = vmatpush1.msra.mxu0 0.0
        %1143 = vmatprep.subr.mxu0 0.0
        %1144 = vmatpush1.msra.mxu0 0.0
        %1145 = vmatprep.subr.mxu0 0.0
        %1146 = vmatpush1.msra.mxu0 0.0
        %1147 = vmatprep.subr.mxu0 %v532
        %1148 = vmatpush1.msra.mxu0 %v531
        %1149 = vmatprep.subr.mxu0 %v530
        %1150 = vmatpush1.msra.mxu0 %v529
        %1151 = vmatprep.subr.mxu0 %v528
        %1152 = vmatpush1.msra.mxu0 %v527
        %1153 = vmatprep.subr.mxu0 %v526
        %1154 = vmatpush1.msra.mxu0 %v525
        %1155 = vmatprep.subr.mxu0 0.0
        %1156 = vmatpush2.msra.mxu0 0.0
        %1157 = vmatprep.subr.mxu0 0.0
        %1158 = vmatpush2.msra.mxu0 0.0
        %1159 = vmatprep.subr.mxu0 0.0
        %1160 = vmatpush2.msra.mxu0 0.0
        %1161 = vmatprep.subr.mxu0 0.0
        %1162 = vmatpush2.msra.mxu0 0.0
        %1163 = vmatprep.subr.mxu0 0.0
        %1164 = vmatpush2.msra.mxu0 0.0
        %1165 = vmatprep.subr.mxu0 0.0
        %1166 = vmatpush2.msra.mxu0 0.0
        %1167 = vmatprep.subr.mxu0 0.0
        %1168 = vmatpush2.msra.mxu0 0.0
        %1169 = vmatprep.subr.mxu0 0.0
        %1170 = vmatpush2.msra.mxu0 0.0
        %1171 = vmatprep.subr.mxu0 0.0
        %1172 = vmatpush2.msra.mxu0 0.0
        %1173 = vmatprep.subr.mxu0 0.0
        %1174 = vmatpush2.msra.mxu0 0.0
        %1175 = vmatprep.subr.mxu0 0.0
        %1176 = vmatpush2.msra.mxu0 0.0
        %1177 = vmatprep.subr.mxu0 0.0
        %1178 = vmatpush2.msra.mxu0 0.0
        %1179 = vmatprep.subr.mxu0 0.0
        %1180 = vmatpush2.msra.mxu0 0.0
        %1181 = vmatprep.subr.mxu0 0.0
        %1182 = vmatpush2.msra.mxu0 0.0
        %1183 = vmatprep.subr.mxu0 0.0
        %1184 = vmatpush2.msra.mxu0 0.0
        %1185 = vmatprep.subr.mxu0 0.0
        %1186 = vmatpush2.msra.mxu0 0.0
        %1187 = vmatprep.mubr.f32.mxu0 0.0
        %1188 = vmatmul.mubr.f32.gmra.mxu0 %v1028
        %v1189 = vpop.f32.mrf.mxu0
        %v1190 = vadd.f32 %v870, %v1189
        %v1191 = vpop.f32.mrf.mxu0
        %v1192 = vadd.f32 %v870, %v1191
        %1193 = vmatprep.mubr.f32.mxu0 0.0
        %1194 = vmatmul.mubr.f32.gmra.mxu0 %v1031
        %v1195 = vpop.f32.mrf.mxu0
        %v1196 = vadd.f32 %v875, %v1195
        %v1197 = vpop.f32.mrf.mxu0
        %v1198 = vadd.f32 %v875, %v1197
        %1199 = vmatprep.mubr.f32.mxu0 0.0
        %1200 = vmatmul.mubr.f32.gmra.mxu0 %v1034
        %v1201 = vpop.f32.mrf.mxu0
        %v1202 = vadd.f32 %v880, %v1201
        %v1203 = vpop.f32.mrf.mxu0
        %v1204 = vadd.f32 %v880, %v1203
        %1205 = vmatprep.mubr.f32.mxu0 0.0
        %1206 = vmatmul.mubr.f32.gmra.mxu0 %v1037
        %v1207 = vpop.f32.mrf.mxu0
        %v1208 = vadd.f32 %v885, %v1207
        %v1209 = vpop.f32.mrf.mxu0
        %v1210 = vadd.f32 %v885, %v1209
        %1211 = vmatprep.mubr.f32.mxu0 0.0
        %1212 = vmatmul.mubr.f32.gmra.mxu0 %v1040
        %v1213 = vpop.f32.mrf.mxu0
        %v1214 = vadd.f32 %v890, %v1213
        %v1215 = vpop.f32.mrf.mxu0
        %v1216 = vadd.f32 %v890, %v1215
        %1217 = vmatprep.mubr.f32.mxu0 0.0
        %1218 = vmatmul.mubr.f32.gmra.mxu0 %v1043
        %v1219 = vpop.f32.mrf.mxu0
        %v1220 = vadd.f32 %v895, %v1219
        %v1221 = vpop.f32.mrf.mxu0
        %v1222 = vadd.f32 %v895, %v1221
        %1223 = vmatprep.mubr.f32.mxu0 0.0
        %1224 = vmatmul.mubr.f32.gmra.mxu0 %v1046
        %v1225 = vpop.f32.mrf.mxu0
        %v1226 = vadd.f32 %v900, %v1225
        %v1227 = vpop.f32.mrf.mxu0
        %v1228 = vadd.f32 %v900, %v1227
        %1229 = vmatprep.mubr.f32.mxu0 0.0
        %1230 = vmatmul.mubr.f32.gmra.mxu0 %v1049
        %v1231 = vpop.f32.mrf.mxu0
        %v1232 = vadd.f32 %v905, %v1231
        %v1233 = vpop.f32.mrf.mxu0
        %v1234 = vadd.f32 %v905, %v1233
        %1235 = vmatprep.mubr.f32.mxu0 0.0
        %1236 = vmatmul.mubr.f32.gmra.mxu0 %v1052
        %v1237 = vpop.f32.mrf.mxu0
        %v1238 = vadd.f32 %v910, %v1237
        %v1239 = vpop.f32.mrf.mxu0
        %v1240 = vadd.f32 %v910, %v1239
        %1241 = vmatprep.mubr.f32.mxu0 0.0
        %1242 = vmatmul.mubr.f32.gmra.mxu0 %v1055
        %v1243 = vpop.f32.mrf.mxu0
        %v1244 = vadd.f32 %v915, %v1243
        %v1245 = vpop.f32.mrf.mxu0
        %v1246 = vadd.f32 %v915, %v1245
        %1247 = vmatprep.mubr.f32.mxu0 0.0
        %1248 = vmatmul.mubr.f32.gmra.mxu0 %v1058
        %v1249 = vpop.f32.mrf.mxu0
        %v1250 = vadd.f32 %v920, %v1249
        %v1251 = vpop.f32.mrf.mxu0
        %v1252 = vadd.f32 %v920, %v1251
        %1253 = vmatprep.mubr.f32.mxu0 0.0
        %1254 = vmatmul.mubr.f32.gmra.mxu0 %v1061
        %v1255 = vpop.f32.mrf.mxu0
        %v1256 = vadd.f32 %v925, %v1255
        %v1257 = vpop.f32.mrf.mxu0
        %v1258 = vadd.f32 %v925, %v1257
        %1259 = vmatprep.mubr.f32.mxu0 0.0
        %1260 = vmatmul.mubr.f32.gmra.mxu0 %v1064
        %v1261 = vpop.f32.mrf.mxu0
        %v1262 = vadd.f32 %v930, %v1261
        %v1263 = vpop.f32.mrf.mxu0
        %v1264 = vadd.f32 %v930, %v1263
        %1265 = vmatprep.mubr.f32.mxu0 0.0
        %1266 = vmatmul.mubr.f32.gmra.mxu0 %v1067
        %v1267 = vpop.f32.mrf.mxu0
        %v1268 = vadd.f32 %v935, %v1267
        %v1269 = vpop.f32.mrf.mxu0
        %v1270 = vadd.f32 %v935, %v1269
        %1271 = vmatprep.mubr.f32.mxu0 0.0
        %1272 = vmatmul.mubr.f32.gmra.mxu0 %v1070
        %v1273 = vpop.f32.mrf.mxu0
        %v1274 = vadd.f32 %v940, %v1273
        %v1275 = vpop.f32.mrf.mxu0
        %v1276 = vadd.f32 %v940, %v1275
        %1277 = vmatprep.mubr.f32.mxu0 0.0
        %1278 = vmatmul.mubr.f32.gmra.mxu0 %v1073
        %v1279 = vpop.f32.mrf.mxu0
        %v1280 = vadd.f32 %v945, %v1279
        %v1281 = vpop.f32.mrf.mxu0
        %v1282 = vadd.f32 %v945, %v1281
        %1283 = vmatprep.mubr.f32.mxu0 0.0
        %1284 = vmatmul.mubr.f32.gmra.mxu0 %v1076
        %v1285 = vpop.f32.mrf.mxu0
        %v1286 = vadd.f32 %v950, %v1285
        %v1287 = vpop.f32.mrf.mxu0
        %v1288 = vadd.f32 %v950, %v1287
        %1289 = vmatprep.mubr.f32.mxu0 0.0
        %1290 = vmatmul.mubr.f32.gmra.mxu0 %v1079
        %v1291 = vpop.f32.mrf.mxu0
        %v1292 = vadd.f32 %v955, %v1291
        %v1293 = vpop.f32.mrf.mxu0
        %v1294 = vadd.f32 %v955, %v1293
        %1295 = vmatprep.mubr.f32.mxu0 0.0
        %1296 = vmatmul.mubr.f32.gmra.mxu0 %v1082
        %v1297 = vpop.f32.mrf.mxu0
        %v1298 = vadd.f32 %v960, %v1297
        %v1299 = vpop.f32.mrf.mxu0
        %v1300 = vadd.f32 %v960, %v1299
        %1301 = vmatprep.mubr.f32.mxu0 0.0
        %1302 = vmatmul.mubr.f32.gmra.mxu0 %v1085
        %v1303 = vpop.f32.mrf.mxu0
        %v1304 = vadd.f32 %v965, %v1303
        %v1305 = vpop.f32.mrf.mxu0
        %v1306 = vadd.f32 %v965, %v1305
        %1307 = vmatprep.mubr.f32.mxu0 0.0
        %1308 = vmatmul.mubr.f32.gmra.mxu0 %v1088
        %v1309 = vpop.f32.mrf.mxu0
        %v1310 = vadd.f32 %v970, %v1309
        %v1311 = vpop.f32.mrf.mxu0
        %v1312 = vadd.f32 %v970, %v1311
        %1313 = vmatprep.mubr.f32.mxu0 0.0
        %1314 = vmatmul.mubr.f32.gmra.mxu0 %v1091
        %v1315 = vpop.f32.mrf.mxu0
        %v1316 = vadd.f32 %v975, %v1315
        %v1317 = vpop.f32.mrf.mxu0
        %v1318 = vadd.f32 %v975, %v1317
        %1319 = vmatprep.mubr.f32.mxu0 0.0
        %1320 = vmatmul.mubr.f32.gmra.mxu0 %v1094
        %v1321 = vpop.f32.mrf.mxu0
        %v1322 = vadd.f32 %v980, %v1321
        %v1323 = vpop.f32.mrf.mxu0
        %v1324 = vadd.f32 %v980, %v1323
        %1325 = vmatprep.mubr.f32.mxu0 0.0
        %1326 = vmatmul.mubr.f32.gmra.mxu0 %v1097
        %v1327 = vpop.f32.mrf.mxu0
        %v1328 = vadd.f32 %v985, %v1327
        %v1329 = vpop.f32.mrf.mxu0
        %v1330 = vadd.f32 %v985, %v1329
        %1331 = vmatprep.mubr.f32.mxu0 0.0
        %1332 = vmatmul.mubr.f32.gmra.mxu0 %v1100
        %v1333 = vpop.f32.mrf.mxu0
        %v1334 = vadd.f32 %v990, %v1333
        %v1335 = vpop.f32.mrf.mxu0
        %v1336 = vadd.f32 %v990, %v1335
        %1337 = vmatprep.mubr.f32.mxu0 0.0
        %1338 = vmatmul.mubr.f32.gmra.mxu0 %v1103
        %v1339 = vpop.f32.mrf.mxu0
        %v1340 = vadd.f32 %v995, %v1339
        %v1341 = vpop.f32.mrf.mxu0
        %v1342 = vadd.f32 %v995, %v1341
        %1343 = vmatprep.mubr.f32.mxu0 0.0
        %1344 = vmatmul.mubr.f32.gmra.mxu0 %v1106
        %v1345 = vpop.f32.mrf.mxu0
        %v1346 = vadd.f32 %v1000, %v1345
        %v1347 = vpop.f32.mrf.mxu0
        %v1348 = vadd.f32 %v1000, %v1347
        %1349 = vmatprep.mubr.f32.mxu0 0.0
        %1350 = vmatmul.mubr.f32.gmra.mxu0 %v1109
        %v1351 = vpop.f32.mrf.mxu0
        %v1352 = vadd.f32 %v1005, %v1351
        %v1353 = vpop.f32.mrf.mxu0
        %v1354 = vadd.f32 %v1005, %v1353
        %1355 = vmatprep.mubr.f32.mxu0 0.0
        %1356 = vmatmul.mubr.f32.gmra.mxu0 %v1112
        %v1357 = vpop.f32.mrf.mxu0
        %v1358 = vadd.f32 %v1010, %v1357
        %v1359 = vpop.f32.mrf.mxu0
        %v1360 = vadd.f32 %v1010, %v1359
        %1361 = vmatprep.mubr.f32.mxu0 0.0
        %1362 = vmatmul.mubr.f32.gmra.mxu0 %v1115
        %v1363 = vpop.f32.mrf.mxu0
        %v1364 = vadd.f32 %v1015, %v1363
        %v1365 = vpop.f32.mrf.mxu0
        %v1366 = vadd.f32 %v1015, %v1365
        %1367 = vmatprep.mubr.f32.mxu0 0.0
        %1368 = vmatmul.mubr.f32.gmra.mxu0 %v1118
        %v1369 = vpop.f32.mrf.mxu0
        %v1370 = vadd.f32 %v1020, %v1369
        %v1371 = vpop.f32.mrf.mxu0
        %v1372 = vadd.f32 %v1020, %v1371
        %1373 = vmatprep.mubr.f32.mxu0 0.0
        %1374 = vmatmul.mubr.f32.gmra.mxu0 %v1121
        %v1375 = vpop.f32.mrf.mxu0
        %v1376 = vadd.f32 %v1025, %v1375
        %v1377 = vpop.f32.mrf.mxu0
        %v1378 = vadd.f32 %v1025, %v1377
        %1379 = vdwg.mxu0
        %v1380 = vmul.f32 %v1190, 2.0
        %v1381 = vmul.f32 %v1192, 2.0
        %v1382 = vmul.f32 %v1196, 2.0
        %v1383 = vmul.f32 %v1198, 2.0
        %v1384 = vmul.f32 %v1202, 2.0
        %v1385 = vmul.f32 %v1204, 2.0
        %v1386 = vmul.f32 %v1208, 2.0
        %v1387 = vmul.f32 %v1210, 2.0
        %v1388 = vmul.f32 %v1214, 2.0
        %v1389 = vmul.f32 %v1216, 2.0
        %v1390 = vmul.f32 %v1220, 2.0
        %v1391 = vmul.f32 %v1222, 2.0
        %v1392 = vmul.f32 %v1226, 2.0
        %v1393 = vmul.f32 %v1228, 2.0
        %v1394 = vmul.f32 %v1232, 2.0
        %v1395 = vmul.f32 %v1234, 2.0
        %v1396 = vmul.f32 %v1238, 2.0
        %v1397 = vmul.f32 %v1240, 2.0
        %v1398 = vmul.f32 %v1244, 2.0
        %v1399 = vmul.f32 %v1246, 2.0
        %v1400 = vmul.f32 %v1250, 2.0
        %v1401 = vmul.f32 %v1252, 2.0
        %v1402 = vmul.f32 %v1256, 2.0
        %v1403 = vmul.f32 %v1258, 2.0
        %v1404 = vmul.f32 %v1262, 2.0
        %v1405 = vmul.f32 %v1264, 2.0
        %v1406 = vmul.f32 %v1268, 2.0
        %v1407 = vmul.f32 %v1270, 2.0
        %v1408 = vmul.f32 %v1274, 2.0
        %v1409 = vmul.f32 %v1276, 2.0
        %v1410 = vmul.f32 %v1280, 2.0
        %v1411 = vmul.f32 %v1282, 2.0
        %v1412 = vmul.f32 %v1286, 2.0
        %v1413 = vmul.f32 %v1288, 2.0
        %v1414 = vmul.f32 %v1292, 2.0
        %v1415 = vmul.f32 %v1294, 2.0
        %v1416 = vmul.f32 %v1298, 2.0
        %v1417 = vmul.f32 %v1300, 2.0
        %v1418 = vmul.f32 %v1304, 2.0
        %v1419 = vmul.f32 %v1306, 2.0
        %v1420 = vmul.f32 %v1310, 2.0
        %v1421 = vmul.f32 %v1312, 2.0
        %v1422 = vmul.f32 %v1316, 2.0
        %v1423 = vmul.f32 %v1318, 2.0
        %v1424 = vmul.f32 %v1322, 2.0
        %v1425 = vmul.f32 %v1324, 2.0
        %v1426 = vmul.f32 %v1328, 2.0
        %v1427 = vmul.f32 %v1330, 2.0
        %v1428 = vmul.f32 %v1334, 2.0
        %v1429 = vmul.f32 %v1336, 2.0
        %v1430 = vmul.f32 %v1340, 2.0
        %v1431 = vmul.f32 %v1342, 2.0
        %v1432 = vmul.f32 %v1346, 2.0
        %v1433 = vmul.f32 %v1348, 2.0
        %v1434 = vmul.f32 %v1352, 2.0
        %v1435 = vmul.f32 %v1354, 2.0
        %v1436 = vmul.f32 %v1358, 2.0
        %v1437 = vmul.f32 %v1360, 2.0
        %v1438 = vmul.f32 %v1364, 2.0
        %v1439 = vmul.f32 %v1366, 2.0
        %v1440 = vmul.f32 %v1370, 2.0
        %v1441 = vmul.f32 %v1372, 2.0
        %v1442 = vmul.f32 %v1376, 2.0
        %v1443 = vmul.f32 %v1378, 2.0
        %v1444 = vmax.f32 %v1380, %v1384
        %v1445 = vmax.f32 %v1382, %v1386
        %v1446 = vmax.f32 %v1444, %v1388
        %v1447 = vmax.f32 %v1445, %v1390
        %v1448 = vmax.f32 %v1446, %v1392
        %v1449 = vmax.f32 %v1447, %v1394
        %v1450 = vmax.f32 %v1448, %v1396
        %v1451 = vmax.f32 %v1449, %v1398
        %v1452 = vmax.f32 %v1450, %v1400
        %v1453 = vmax.f32 %v1451, %v1402
        %v1454 = vmax.f32 %v1452, %v1404
        %v1455 = vmax.f32 %v1453, %v1406
        %v1456 = vmax.f32 %v1454, %v1408
        %v1457 = vmax.f32 %v1455, %v1410
        %v1458 = vmax.f32 %v1456, %v1412
        %v1459 = vmax.f32 %v1457, %v1414
        %v1460 = vmax.f32 %v1458, %v1416
        %v1461 = vmax.f32 %v1459, %v1418
        %v1462 = vmax.f32 %v1460, %v1420
        %v1463 = vmax.f32 %v1461, %v1422
        %v1464 = vmax.f32 %v1462, %v1424
        %v1465 = vmax.f32 %v1463, %v1426
        %v1466 = vmax.f32 %v1464, %v1428
        %v1467 = vmax.f32 %v1465, %v1430
        %v1468 = vmax.f32 %v1466, %v1432
        %v1469 = vmax.f32 %v1467, %v1434
        %v1470 = vmax.f32 %v1468, %v1436
        %v1471 = vmax.f32 %v1469, %v1438
        %v1472 = vmax.f32 %v1470, %v1440
        %v1473 = vmax.f32 %v1471, %v1442
        %v1474 = vmax.f32 %v1472, %v1473
        %v1475 = vrot.slane %v1474, 4
        %v1476 = vmax.f32 %v1474, %v1475
        %v1477 = vrot.slane %v1476, 2
        %v1478 = vmax.f32 %v1476, %v1477
        %v1479 = vrot.slane %v1478, 1
        %v1480 = vmax.f32 %v1478, %v1479
        %v1481 = vmax.f32 %v1381, %v1385
        %v1482 = vmax.f32 %v1383, %v1387
        %v1483 = vmax.f32 %v1481, %v1389
        %v1484 = vmax.f32 %v1482, %v1391
        %v1485 = vmax.f32 %v1483, %v1393
        %v1486 = vmax.f32 %v1484, %v1395
        %v1487 = vmax.f32 %v1485, %v1397
        %v1488 = vmax.f32 %v1486, %v1399
        %v1489 = vmax.f32 %v1487, %v1401
        %v1490 = vmax.f32 %v1488, %v1403
        %v1491 = vmax.f32 %v1489, %v1405
        %v1492 = vmax.f32 %v1490, %v1407
        %v1493 = vmax.f32 %v1491, %v1409
        %v1494 = vmax.f32 %v1492, %v1411
        %v1495 = vmax.f32 %v1493, %v1413
        %v1496 = vmax.f32 %v1494, %v1415
        %v1497 = vmax.f32 %v1495, %v1417
        %v1498 = vmax.f32 %v1496, %v1419
        %v1499 = vmax.f32 %v1497, %v1421
        %v1500 = vmax.f32 %v1498, %v1423
        %v1501 = vmax.f32 %v1499, %v1425
        %v1502 = vmax.f32 %v1500, %v1427
        %v1503 = vmax.f32 %v1501, %v1429
        %v1504 = vmax.f32 %v1502, %v1431
        %v1505 = vmax.f32 %v1503, %v1433
        %v1506 = vmax.f32 %v1504, %v1435
        %v1507 = vmax.f32 %v1505, %v1437
        %v1508 = vmax.f32 %v1506, %v1439
        %v1509 = vmax.f32 %v1507, %v1441
        %v1510 = vmax.f32 %v1508, %v1443
        %v1511 = vmax.f32 %v1509, %v1510
        %v1512 = vrot.slane %v1511, 4
        %v1513 = vmax.f32 %v1511, %v1512
        %v1514 = vrot.slane %v1513, 2
        %v1515 = vmax.f32 %v1513, %v1514
        %v1516 = vrot.slane %v1515, 1
        %v1517 = vmax.f32 %v1515, %v1516
        %v1518 = vsub.f32 %v1380, %v1480
        %v1519 = vsub.f32 %v1381, %v1517
        %v1520 = vsub.f32 %v1382, %v1480
        %v1521 = vsub.f32 %v1383, %v1517
        %v1522 = vsub.f32 %v1384, %v1480
        %v1523 = vsub.f32 %v1385, %v1517
        %v1524 = vsub.f32 %v1386, %v1480
        %v1525 = vsub.f32 %v1387, %v1517
        %v1526 = vsub.f32 %v1388, %v1480
        %v1527 = vsub.f32 %v1389, %v1517
        %v1528 = vsub.f32 %v1390, %v1480
        %v1529 = vsub.f32 %v1391, %v1517
        %v1530 = vsub.f32 %v1392, %v1480
        %v1531 = vsub.f32 %v1393, %v1517
        %v1532 = vsub.f32 %v1394, %v1480
        %v1533 = vsub.f32 %v1395, %v1517
        %v1534 = vsub.f32 %v1396, %v1480
        %v1535 = vsub.f32 %v1397, %v1517
        %v1536 = vsub.f32 %v1398, %v1480
        %v1537 = vsub.f32 %v1399, %v1517
        %v1538 = vsub.f32 %v1400, %v1480
        %v1539 = vsub.f32 %v1401, %v1517
        %v1540 = vsub.f32 %v1402, %v1480
        %v1541 = vsub.f32 %v1403, %v1517
        %v1542 = vsub.f32 %v1404, %v1480
        %v1543 = vsub.f32 %v1405, %v1517
        %v1544 = vsub.f32 %v1406, %v1480
        %v1545 = vsub.f32 %v1407, %v1517
        %v1546 = vsub.f32 %v1408, %v1480
        %v1547 = vsub.f32 %v1409, %v1517
        %v1548 = vsub.f32 %v1410, %v1480
        %v1549 = vsub.f32 %v1411, %v1517
        %v1550 = vsub.f32 %v1412, %v1480
        %v1551 = vsub.f32 %v1413, %v1517
        %v1552 = vsub.f32 %v1414, %v1480
        %v1553 = vsub.f32 %v1415, %v1517
        %v1554 = vsub.f32 %v1416, %v1480
        %v1555 = vsub.f32 %v1417, %v1517
        %v1556 = vsub.f32 %v1418, %v1480
        %v1557 = vsub.f32 %v1419, %v1517
        %v1558 = vsub.f32 %v1420, %v1480
        %v1559 = vsub.f32 %v1421, %v1517
        %v1560 = vsub.f32 %v1422, %v1480
        %v1561 = vsub.f32 %v1423, %v1517
        %v1562 = vsub.f32 %v1424, %v1480
        %v1563 = vsub.f32 %v1425, %v1517
        %v1564 = vsub.f32 %v1426, %v1480
        %v1565 = vsub.f32 %v1427, %v1517
        %v1566 = vsub.f32 %v1428, %v1480
        %v1567 = vsub.f32 %v1429, %v1517
        %v1568 = vsub.f32 %v1430, %v1480
        %v1569 = vsub.f32 %v1431, %v1517
        %v1570 = vsub.f32 %v1432, %v1480
        %v1571 = vsub.f32 %v1433, %v1517
        %v1572 = vsub.f32 %v1434, %v1480
        %v1573 = vsub.f32 %v1435, %v1517
        %v1574 = vsub.f32 %v1436, %v1480
        %v1575 = vsub.f32 %v1437, %v1517
        %v1576 = vsub.f32 %v1438, %v1480
        %v1577 = vsub.f32 %v1439, %v1517
        %v1578 = vsub.f32 %v1440, %v1480
        %v1579 = vsub.f32 %v1441, %v1517
        %v1580 = vsub.f32 %v1442, %v1480
        %v1581 = vsub.f32 %v1443, %v1517
        %v1582 = vmul.f32 %v1518, 1.442695
        %v1583 = vpow.pop %v1582
        %v1584 = vmul.f32 %v1519, 1.442695
        %v1585 = vpow.pop %v1584
        %v1586 = vmul.f32 %v1520, 1.442695
        %v1587 = vpow.pop %v1586
        %v1588 = vmul.f32 %v1521, 1.442695
        %v1589 = vpow.pop %v1588
        %v1590 = vmul.f32 %v1522, 1.442695
        %v1591 = vpow.pop %v1590
        %v1592 = vmul.f32 %v1523, 1.442695
        %v1593 = vpow.pop %v1592
        %v1594 = vmul.f32 %v1524, 1.442695
        %v1595 = vpow.pop %v1594
        %v1596 = vmul.f32 %v1525, 1.442695
        %v1597 = vpow.pop %v1596
        %v1598 = vmul.f32 %v1526, 1.442695
        %v1599 = vpow.pop %v1598
        %v1600 = vmul.f32 %v1527, 1.442695
        %v1601 = vpow.pop %v1600
        %v1602 = vmul.f32 %v1528, 1.442695
        %v1603 = vpow.pop %v1602
        %v1604 = vmul.f32 %v1529, 1.442695
        %v1605 = vpow.pop %v1604
        %v1606 = vmul.f32 %v1530, 1.442695
        %v1607 = vpow.pop %v1606
        %v1608 = vmul.f32 %v1531, 1.442695
        %v1609 = vpow.pop %v1608
        %v1610 = vmul.f32 %v1532, 1.442695
        %v1611 = vpow.pop %v1610
        %v1612 = vmul.f32 %v1533, 1.442695
        %v1613 = vpow.pop %v1612
        %v1614 = vmul.f32 %v1534, 1.442695
        %v1615 = vpow.pop %v1614
        %v1616 = vmul.f32 %v1535, 1.442695
        %v1617 = vpow.pop %v1616
        %v1618 = vmul.f32 %v1536, 1.442695
        %v1619 = vpow.pop %v1618
        %v1620 = vmul.f32 %v1537, 1.442695
        %v1621 = vpow.pop %v1620
        %v1622 = vmul.f32 %v1538, 1.442695
        %v1623 = vpow.pop %v1622
        %v1624 = vmul.f32 %v1539, 1.442695
        %v1625 = vpow.pop %v1624
        %v1626 = vmul.f32 %v1540, 1.442695
        %v1627 = vpow.pop %v1626
        %v1628 = vmul.f32 %v1541, 1.442695
        %v1629 = vpow.pop %v1628
        %v1630 = vmul.f32 %v1542, 1.442695
        %v1631 = vpow.pop %v1630
        %v1632 = vmul.f32 %v1543, 1.442695
        %v1633 = vpow.pop %v1632
        %v1634 = vmul.f32 %v1544, 1.442695
        %v1635 = vpow.pop %v1634
        %v1636 = vmul.f32 %v1545, 1.442695
        %v1637 = vpow.pop %v1636
        %v1638 = vmul.f32 %v1546, 1.442695
        %v1639 = vpow.pop %v1638
        %v1640 = vmul.f32 %v1547, 1.442695
        %v1641 = vpow.pop %v1640
        %v1642 = vmul.f32 %v1548, 1.442695
        %v1643 = vpow.pop %v1642
        %v1644 = vmul.f32 %v1549, 1.442695
        %v1645 = vpow.pop %v1644
        %v1646 = vmul.f32 %v1550, 1.442695
        %v1647 = vpow.pop %v1646
        %v1648 = vmul.f32 %v1551, 1.442695
        %v1649 = vpow.pop %v1648
        %v1650 = vmul.f32 %v1552, 1.442695
        %v1651 = vpow.pop %v1650
        %v1652 = vmul.f32 %v1553, 1.442695
        %v1653 = vpow.pop %v1652
        %v1654 = vmul.f32 %v1554, 1.442695
        %v1655 = vpow.pop %v1654
        %v1656 = vmul.f32 %v1555, 1.442695
        %v1657 = vpow.pop %v1656
        %v1658 = vmul.f32 %v1556, 1.442695
        %v1659 = vpow.pop %v1658
        %v1660 = vmul.f32 %v1557, 1.442695
        %v1661 = vpow.pop %v1660
        %v1662 = vmul.f32 %v1558, 1.442695
        %v1663 = vpow.pop %v1662
        %v1664 = vmul.f32 %v1559, 1.442695
        %v1665 = vpow.pop %v1664
        %v1666 = vmul.f32 %v1560, 1.442695
        %v1667 = vpow.pop %v1666
        %v1668 = vmul.f32 %v1561, 1.442695
        %v1669 = vpow.pop %v1668
        %v1670 = vmul.f32 %v1562, 1.442695
        %v1671 = vpow.pop %v1670
        %v1672 = vmul.f32 %v1563, 1.442695
        %v1673 = vpow.pop %v1672
        %v1674 = vmul.f32 %v1564, 1.442695
        %v1675 = vpow.pop %v1674
        %v1676 = vmul.f32 %v1565, 1.442695
        %v1677 = vpow.pop %v1676
        %v1678 = vmul.f32 %v1566, 1.442695
        %v1679 = vpow.pop %v1678
        %v1680 = vmul.f32 %v1567, 1.442695
        %v1681 = vpow.pop %v1680
        %v1682 = vmul.f32 %v1568, 1.442695
        %v1683 = vpow.pop %v1682
        %v1684 = vmul.f32 %v1569, 1.442695
        %v1685 = vpow.pop %v1684
        %v1686 = vmul.f32 %v1570, 1.442695
        %v1687 = vpow.pop %v1686
        %v1688 = vmul.f32 %v1571, 1.442695
        %v1689 = vpow.pop %v1688
        %v1690 = vmul.f32 %v1572, 1.442695
        %v1691 = vpow.pop %v1690
        %v1692 = vmul.f32 %v1573, 1.442695
        %v1693 = vpow.pop %v1692
        %v1694 = vmul.f32 %v1574, 1.442695
        %v1695 = vpow.pop %v1694
        %v1696 = vmul.f32 %v1575, 1.442695
        %v1697 = vpow.pop %v1696
        %v1698 = vmul.f32 %v1576, 1.442695
        %v1699 = vpow.pop %v1698
        %v1700 = vmul.f32 %v1577, 1.442695
        %v1701 = vpow.pop %v1700
        %v1702 = vmul.f32 %v1578, 1.442695
        %v1703 = vpow.pop %v1702
        %v1704 = vmul.f32 %v1579, 1.442695
        %v1705 = vpow.pop %v1704
        %v1706 = vmul.f32 %v1580, 1.442695
        %v1707 = vpow.pop %v1706
        %v1708 = vmul.f32 %v1581, 1.442695
        %v1709 = vpow.pop %v1708
        %v1710 = vadd.f32 %v1583, %v1587
        %v1711 = vadd.f32 %v1710, %v1591
        %v1712 = vadd.f32 %v1711, %v1595
        %v1713 = vadd.f32 %v1712, %v1599
        %v1714 = vadd.f32 %v1713, %v1603
        %v1715 = vadd.f32 %v1714, %v1607
        %v1716 = vadd.f32 %v1715, %v1611
        %v1717 = vadd.f32 %v1716, %v1615
        %v1718 = vadd.f32 %v1717, %v1619
        %v1719 = vadd.f32 %v1718, %v1623
        %v1720 = vadd.f32 %v1719, %v1627
        %v1721 = vadd.f32 %v1720, %v1631
        %v1722 = vadd.f32 %v1721, %v1635
        %v1723 = vadd.f32 %v1722, %v1639
        %v1724 = vadd.f32 %v1723, %v1643
        %v1725 = vadd.f32 %v1724, %v1647
        %v1726 = vadd.f32 %v1725, %v1651
        %v1727 = vadd.f32 %v1726, %v1655
        %v1728 = vadd.f32 %v1727, %v1659
        %v1729 = vadd.f32 %v1728, %v1663
        %v1730 = vadd.f32 %v1729, %v1667
        %v1731 = vadd.f32 %v1730, %v1671
        %v1732 = vadd.f32 %v1731, %v1675
        %v1733 = vadd.f32 %v1732, %v1679
        %v1734 = vadd.f32 %v1733, %v1683
        %v1735 = vadd.f32 %v1734, %v1687
        %v1736 = vadd.f32 %v1735, %v1691
        %v1737 = vadd.f32 %v1736, %v1695
        %v1738 = vadd.f32 %v1737, %v1699
        %v1739 = vadd.f32 %v1738, %v1703
        %v1740 = vadd.f32 %v1739, %v1707
        %v1741 = vrot.slane %v1740, 4
        %v1742 = vadd.f32 %v1740, %v1741
        %v1743 = vrot.slane %v1742, 2
        %v1744 = vadd.f32 %v1742, %v1743
        %v1745 = vrot.slane %v1744, 1
        %v1746 = vadd.f32 %v1744, %v1745
        %v1747 = vadd.f32 %v1585, %v1589
        %v1748 = vadd.f32 %v1747, %v1593
        %v1749 = vadd.f32 %v1748, %v1597
        %v1750 = vadd.f32 %v1749, %v1601
        %v1751 = vadd.f32 %v1750, %v1605
        %v1752 = vadd.f32 %v1751, %v1609
        %v1753 = vadd.f32 %v1752, %v1613
        %v1754 = vadd.f32 %v1753, %v1617
        %v1755 = vadd.f32 %v1754, %v1621
        %v1756 = vadd.f32 %v1755, %v1625
        %v1757 = vadd.f32 %v1756, %v1629
        %v1758 = vadd.f32 %v1757, %v1633
        %v1759 = vadd.f32 %v1758, %v1637
        %v1760 = vadd.f32 %v1759, %v1641
        %v1761 = vadd.f32 %v1760, %v1645
        %v1762 = vadd.f32 %v1761, %v1649
        %v1763 = vadd.f32 %v1762, %v1653
        %v1764 = vadd.f32 %v1763, %v1657
        %v1765 = vadd.f32 %v1764, %v1661
        %v1766 = vadd.f32 %v1765, %v1665
        %v1767 = vadd.f32 %v1766, %v1669
        %v1768 = vadd.f32 %v1767, %v1673
        %v1769 = vadd.f32 %v1768, %v1677
        %v1770 = vadd.f32 %v1769, %v1681
        %v1771 = vadd.f32 %v1770, %v1685
        %v1772 = vadd.f32 %v1771, %v1689
        %v1773 = vadd.f32 %v1772, %v1693
        %v1774 = vadd.f32 %v1773, %v1697
        %v1775 = vadd.f32 %v1774, %v1701
        %v1776 = vadd.f32 %v1775, %v1705
        %v1777 = vadd.f32 %v1776, %v1709
        %v1778 = vrot.slane %v1777, 4
        %v1779 = vadd.f32 %v1777, %v1778
        %v1780 = vrot.slane %v1779, 2
        %v1781 = vadd.f32 %v1779, %v1780
        %v1782 = vrot.slane %v1781, 1
        %v1783 = vadd.f32 %v1781, %v1782
        %v1784 = vrcp.pop %v1746
        %v1785 = vrcp.pop %v1783
        %v1786 = vmul.f32 %v1583, %v1784
        %v1787 = vmul.f32 %v1585, %v1785
        %v1788 = vmul.f32 %v1587, %v1784
        %v1789 = vmul.f32 %v1589, %v1785
        %v1790 = vmul.f32 %v1591, %v1784
        %v1791 = vmul.f32 %v1593, %v1785
        %v1792 = vmul.f32 %v1595, %v1784
        %v1793 = vmul.f32 %v1597, %v1785
        %v1794 = vmul.f32 %v1599, %v1784
        %v1795 = vmul.f32 %v1601, %v1785
        %v1796 = vmul.f32 %v1603, %v1784
        %v1797 = vmul.f32 %v1605, %v1785
        %v1798 = vmul.f32 %v1607, %v1784
        %v1799 = vmul.f32 %v1609, %v1785
        %v1800 = vmul.f32 %v1611, %v1784
        %v1801 = vmul.f32 %v1613, %v1785
        %v1802 = vmul.f32 %v1615, %v1784
        %v1803 = vmul.f32 %v1617, %v1785
        %v1804 = vmul.f32 %v1619, %v1784
        %v1805 = vmul.f32 %v1621, %v1785
        %v1806 = vmul.f32 %v1623, %v1784
        %v1807 = vmul.f32 %v1625, %v1785
        %v1808 = vmul.f32 %v1627, %v1784
        %v1809 = vmul.f32 %v1629, %v1785
        %v1810 = vmul.f32 %v1631, %v1784
        %v1811 = vmul.f32 %v1633, %v1785
        %v1812 = vmul.f32 %v1635, %v1784
        %v1813 = vmul.f32 %v1637, %v1785
        %v1814 = vmul.f32 %v1639, %v1784
        %v1815 = vmul.f32 %v1641, %v1785
        %v1816 = vmul.f32 %v1643, %v1784
        %v1817 = vmul.f32 %v1645, %v1785
        %v1818 = vmul.f32 %v1647, %v1784
        %v1819 = vmul.f32 %v1649, %v1785
        %v1820 = vmul.f32 %v1651, %v1784
        %v1821 = vmul.f32 %v1653, %v1785
        %v1822 = vmul.f32 %v1655, %v1784
        %v1823 = vmul.f32 %v1657, %v1785
        %v1824 = vmul.f32 %v1659, %v1784
        %v1825 = vmul.f32 %v1661, %v1785
        %v1826 = vmul.f32 %v1663, %v1784
        %v1827 = vmul.f32 %v1665, %v1785
        %v1828 = vmul.f32 %v1667, %v1784
        %v1829 = vmul.f32 %v1669, %v1785
        %v1830 = vmul.f32 %v1671, %v1784
        %v1831 = vmul.f32 %v1673, %v1785
        %v1832 = vmul.f32 %v1675, %v1784
        %v1833 = vmul.f32 %v1677, %v1785
        %v1834 = vmul.f32 %v1679, %v1784
        %v1835 = vmul.f32 %v1681, %v1785
        %v1836 = vmul.f32 %v1683, %v1784
        %v1837 = vmul.f32 %v1685, %v1785
        %v1838 = vmul.f32 %v1687, %v1784
        %v1839 = vmul.f32 %v1689, %v1785
        %v1840 = vmul.f32 %v1691, %v1784
        %v1841 = vmul.f32 %v1693, %v1785
        %v1842 = vmul.f32 %v1695, %v1784
        %v1843 = vmul.f32 %v1697, %v1785
        %v1844 = vmul.f32 %v1699, %v1784
        %v1845 = vmul.f32 %v1701, %v1785
        %v1846 = vmul.f32 %v1703, %v1784
        %v1847 = vmul.f32 %v1705, %v1785
        %v1848 = vmul.f32 %v1707, %v1784
        %v1849 = vmul.f32 %v1709, %v1785
        %v1850 = vld [vmem:[%s478] sm:$0xff]
        %v1851 = vld [vmem:[%s478 + $0x8] sm:$0xff]
        %v1852 = vld [vmem:[%s478 + $0x10] sm:$0xff]
        %v1853 = vld [vmem:[%s478 + $0x18] sm:$0xff]
        %v1854 = vld [vmem:[%s478 + $0x20] sm:$0xff]
        %v1855 = vld [vmem:[%s478 + $0x28] sm:$0xff]
        %v1856 = vld [vmem:[%s478 + $0x30] sm:$0xff]
        %v1857 = vld [vmem:[%s478 + $0x38] sm:$0xff]
        %v1858 = vld [vmem:[%s478 + $0x40] sm:$0xff]
        %v1859 = vld [vmem:[%s478 + $0x48] sm:$0xff]
        %v1860 = vld [vmem:[%s478 + $0x50] sm:$0xff]
        %v1861 = vld [vmem:[%s478 + $0x58] sm:$0xff]
        %v1862 = vld [vmem:[%s478 + $0x60] sm:$0xff]
        %v1863 = vld [vmem:[%s478 + $0x68] sm:$0xff]
        %v1864 = vld [vmem:[%s478 + $0x70] sm:$0xff]
        %v1865 = vld [vmem:[%s478 + $0x78] sm:$0xff]
        %v1866 = vld [vmem:[%s478 + $0x80] sm:$0xff]
        %v1867 = vld [vmem:[%s478 + $0x88] sm:$0xff]
        %v1868 = vld [vmem:[%s478 + $0x90] sm:$0xff]
        %v1869 = vld [vmem:[%s478 + $0x98] sm:$0xff]
        %v1870 = vld [vmem:[%s478 + $0xa0] sm:$0xff]
        %v1871 = vld [vmem:[%s478 + $0xa8] sm:$0xff]
        %v1872 = vld [vmem:[%s478 + $0xb0] sm:$0xff]
        %v1873 = vld [vmem:[%s478 + $0xb8] sm:$0xff]
        %v1874 = vld [vmem:[%s478 + $0xc0] sm:$0xff]
        %v1875 = vld [vmem:[%s478 + $0xc8] sm:$0xff]
        %v1876 = vld [vmem:[%s478 + $0xd0] sm:$0xff]
        %v1877 = vld [vmem:[%s478 + $0xd8] sm:$0xff]
        %v1878 = vld [vmem:[%s478 + $0xe0] sm:$0xff]
        %v1879 = vld [vmem:[%s478 + $0xe8] sm:$0xff]
        %v1880 = vld [vmem:[%s478 + $0xf0] sm:$0xff]
        %v1881 = vld [vmem:[%s478 + $0xf8] sm:$0xff]
        %v1882 = vadd.f32 %v1786, %v1787
        %1883 = vadd.xlane.f32.xlu0 %v1882
        %v1884 = vpop.xlane.xlu0 %1883
        %v1885 = vadd.f32 %v1788, %v1789
        %1886 = vadd.xlane.f32.xlu0 %v1885
        %v1887 = vpop.xlane.xlu0 %1886
        %v1888 = vadd.f32 %v1790, %v1791
        %1889 = vadd.xlane.f32.xlu0 %v1888
        %v1890 = vpop.xlane.xlu0 %1889
        %v1891 = vadd.f32 %v1792, %v1793
        %1892 = vadd.xlane.f32.xlu0 %v1891
        %v1893 = vpop.xlane.xlu0 %1892
        %v1894 = vadd.f32 %v1794, %v1795
        %1895 = vadd.xlane.f32.xlu0 %v1894
        %v1896 = vpop.xlane.xlu0 %1895
        %v1897 = vadd.f32 %v1796, %v1797
        %1898 = vadd.xlane.f32.xlu0 %v1897
        %v1899 = vpop.xlane.xlu0 %1898
        %v1900 = vadd.f32 %v1798, %v1799
        %1901 = vadd.xlane.f32.xlu0 %v1900
        %v1902 = vpop.xlane.xlu0 %1901
        %v1903 = vadd.f32 %v1800, %v1801
        %1904 = vadd.xlane.f32.xlu0 %v1903
        %v1905 = vpop.xlane.xlu0 %1904
        %v1906 = vadd.f32 %v1802, %v1803
        %1907 = vadd.xlane.f32.xlu0 %v1906
        %v1908 = vpop.xlane.xlu0 %1907
        %v1909 = vadd.f32 %v1804, %v1805
        %1910 = vadd.xlane.f32.xlu0 %v1909
        %v1911 = vpop.xlane.xlu0 %1910
        %v1912 = vadd.f32 %v1806, %v1807
        %1913 = vadd.xlane.f32.xlu0 %v1912
        %v1914 = vpop.xlane.xlu0 %1913
        %v1915 = vadd.f32 %v1808, %v1809
        %1916 = vadd.xlane.f32.xlu0 %v1915
        %v1917 = vpop.xlane.xlu0 %1916
        %v1918 = vadd.f32 %v1810, %v1811
        %1919 = vadd.xlane.f32.xlu0 %v1918
        %v1920 = vpop.xlane.xlu0 %1919
        %v1921 = vadd.f32 %v1812, %v1813
        %1922 = vadd.xlane.f32.xlu0 %v1921
        %v1923 = vpop.xlane.xlu0 %1922
        %v1924 = vadd.f32 %v1814, %v1815
        %1925 = vadd.xlane.f32.xlu0 %v1924
        %v1926 = vpop.xlane.xlu0 %1925
        %v1927 = vadd.f32 %v1816, %v1817
        %1928 = vadd.xlane.f32.xlu0 %v1927
        %v1929 = vpop.xlane.xlu0 %1928
        %v1930 = vadd.f32 %v1818, %v1819
        %1931 = vadd.xlane.f32.xlu0 %v1930
        %v1932 = vpop.xlane.xlu0 %1931
        %v1933 = vadd.f32 %v1820, %v1821
        %1934 = vadd.xlane.f32.xlu0 %v1933
        %v1935 = vpop.xlane.xlu0 %1934
        %v1936 = vadd.f32 %v1822, %v1823
        %1937 = vadd.xlane.f32.xlu0 %v1936
        %v1938 = vpop.xlane.xlu0 %1937
        %v1939 = vadd.f32 %v1824, %v1825
        %1940 = vadd.xlane.f32.xlu0 %v1939
        %v1941 = vpop.xlane.xlu0 %1940
        %v1942 = vadd.f32 %v1826, %v1827
        %1943 = vadd.xlane.f32.xlu0 %v1942
        %v1944 = vpop.xlane.xlu0 %1943
        %v1945 = vadd.f32 %v1828, %v1829
        %1946 = vadd.xlane.f32.xlu0 %v1945
        %v1947 = vpop.xlane.xlu0 %1946
        %v1948 = vadd.f32 %v1830, %v1831
        %1949 = vadd.xlane.f32.xlu0 %v1948
        %v1950 = vpop.xlane.xlu0 %1949
        %v1951 = vadd.f32 %v1832, %v1833
        %1952 = vadd.xlane.f32.xlu0 %v1951
        %v1953 = vpop.xlane.xlu0 %1952
        %v1954 = vadd.f32 %v1834, %v1835
        %1955 = vadd.xlane.f32.xlu0 %v1954
        %v1956 = vpop.xlane.xlu0 %1955
        %v1957 = vadd.f32 %v1836, %v1837
        %1958 = vadd.xlane.f32.xlu0 %v1957
        %v1959 = vpop.xlane.xlu0 %1958
        %v1960 = vadd.f32 %v1838, %v1839
        %1961 = vadd.xlane.f32.xlu0 %v1960
        %v1962 = vpop.xlane.xlu0 %1961
        %v1963 = vadd.f32 %v1840, %v1841
        %1964 = vadd.xlane.f32.xlu0 %v1963
        %v1965 = vpop.xlane.xlu0 %1964
        %v1966 = vadd.f32 %v1842, %v1843
        %1967 = vadd.xlane.f32.xlu0 %v1966
        %v1968 = vpop.xlane.xlu0 %1967
        %v1969 = vadd.f32 %v1844, %v1845
        %1970 = vadd.xlane.f32.xlu0 %v1969
        %v1971 = vpop.xlane.xlu0 %1970
        %v1972 = vadd.f32 %v1846, %v1847
        %1973 = vadd.xlane.f32.xlu0 %v1972
        %v1974 = vpop.xlane.xlu0 %1973
        %v1975 = vadd.f32 %v1848, %v1849
        %1976 = vadd.xlane.f32.xlu0 %v1975
        %v1977 = vpop.xlane.xlu0 %1976
        %v1978 = vadd.f32 %v1850, %v1884
        %v1979 = vadd.f32 %v1851, %v1887
        %v1980 = vadd.f32 %v1852, %v1890
        %v1981 = vadd.f32 %v1853, %v1893
        %v1982 = vadd.f32 %v1854, %v1896
        %v1983 = vadd.f32 %v1855, %v1899
        %v1984 = vadd.f32 %v1856, %v1902
        %v1985 = vadd.f32 %v1857, %v1905
        %v1986 = vadd.f32 %v1858, %v1908
        %v1987 = vadd.f32 %v1859, %v1911
        %v1988 = vadd.f32 %v1860, %v1914
        %v1989 = vadd.f32 %v1861, %v1917
        %v1990 = vadd.f32 %v1862, %v1920
        %v1991 = vadd.f32 %v1863, %v1923
        %v1992 = vadd.f32 %v1864, %v1926
        %v1993 = vadd.f32 %v1865, %v1929
        %v1994 = vadd.f32 %v1866, %v1932
        %v1995 = vadd.f32 %v1867, %v1935
        %v1996 = vadd.f32 %v1868, %v1938
        %v1997 = vadd.f32 %v1869, %v1941
        %v1998 = vadd.f32 %v1870, %v1944
        %v1999 = vadd.f32 %v1871, %v1947
        %v2000 = vadd.f32 %v1872, %v1950
        %v2001 = vadd.f32 %v1873, %v1953
        %v2002 = vadd.f32 %v1874, %v1956
        %v2003 = vadd.f32 %v1875, %v1959
        %v2004 = vadd.f32 %v1876, %v1962
        %v2005 = vadd.f32 %v1877, %v1965
        %v2006 = vadd.f32 %v1878, %v1968
        %v2007 = vadd.f32 %v1879, %v1971
        %v2008 = vadd.f32 %v1880, %v1974
        %v2009 = vadd.f32 %v1881, %v1977
        %vm2010 = vcmask 7168
        %2011 = vst.msk [vmem:[%s478] sm:$0xff] %vm2010, %v1978
        %2012 = vst.msk [vmem:[%s478 + $0x8] sm:$0xff] %vm2010, %v1979
        %2013 = vst.msk [vmem:[%s478 + $0x10] sm:$0xff] %vm2010, %v1980
        %2014 = vst.msk [vmem:[%s478 + $0x18] sm:$0xff] %vm2010, %v1981
        %2015 = vst.msk [vmem:[%s478 + $0x20] sm:$0xff] %vm2010, %v1982
        %2016 = vst.msk [vmem:[%s478 + $0x28] sm:$0xff] %vm2010, %v1983
        %2017 = vst.msk [vmem:[%s478 + $0x30] sm:$0xff] %vm2010, %v1984
        %2018 = vst.msk [vmem:[%s478 + $0x38] sm:$0xff] %vm2010, %v1985
        %2019 = vst.msk [vmem:[%s478 + $0x40] sm:$0xff] %vm2010, %v1986
        %2020 = vst.msk [vmem:[%s478 + $0x48] sm:$0xff] %vm2010, %v1987
        %2021 = vst.msk [vmem:[%s478 + $0x50] sm:$0xff] %vm2010, %v1988
        %2022 = vst.msk [vmem:[%s478 + $0x58] sm:$0xff] %vm2010, %v1989
        %2023 = vst.msk [vmem:[%s478 + $0x60] sm:$0xff] %vm2010, %v1990
        %2024 = vst.msk [vmem:[%s478 + $0x68] sm:$0xff] %vm2010, %v1991
        %2025 = vst.msk [vmem:[%s478 + $0x70] sm:$0xff] %vm2010, %v1992
        %2026 = vst.msk [vmem:[%s478 + $0x78] sm:$0xff] %vm2010, %v1993
        %2027 = vst.msk [vmem:[%s478 + $0x80] sm:$0xff] %vm2010, %v1994
        %2028 = vst.msk [vmem:[%s478 + $0x88] sm:$0xff] %vm2010, %v1995
        %2029 = vst.msk [vmem:[%s478 + $0x90] sm:$0xff] %vm2010, %v1996
        %2030 = vst.msk [vmem:[%s478 + $0x98] sm:$0xff] %vm2010, %v1997
        %2031 = vst.msk [vmem:[%s478 + $0xa0] sm:$0xff] %vm2010, %v1998
        %2032 = vst.msk [vmem:[%s478 + $0xa8] sm:$0xff] %vm2010, %v1999
        %2033 = vst.msk [vmem:[%s478 + $0xb0] sm:$0xff] %vm2010, %v2000
        %2034 = vst.msk [vmem:[%s478 + $0xb8] sm:$0xff] %vm2010, %v2001
        %2035 = vst.msk [vmem:[%s478 + $0xc0] sm:$0xff] %vm2010, %v2002
        %2036 = vst.msk [vmem:[%s478 + $0xc8] sm:$0xff] %vm2010, %v2003
        %2037 = vst.msk [vmem:[%s478 + $0xd0] sm:$0xff] %vm2010, %v2004
        %2038 = vst.msk [vmem:[%s478 + $0xd8] sm:$0xff] %vm2010, %v2005
        %2039 = vst.msk [vmem:[%s478 + $0xe0] sm:$0xff] %vm2010, %v2006
        %2040 = vst.msk [vmem:[%s478 + $0xe8] sm:$0xff] %vm2010, %v2007
        %2041 = vst.msk [vmem:[%s478 + $0xf0] sm:$0xff] %vm2010, %v2008
        %2042 = vst.msk [vmem:[%s478 + $0xf8] sm:$0xff] %vm2010, %v2009
        %v2043 = vlog2.pop %v1746
        %v2044 = vmul.f32 %v2043, 0.6931472
        %v2045 = vlog2.pop %v1783
        %v2046 = vmul.f32 %v2045, 0.6931472
        %v2047 = vadd.f32 %v1480, %v2044
        %v2048 = vadd.f32 %v1517, %v2046
        %v2049 = vmul.f32 %v1786, %v1380
        %v2050 = vmul.f32 %v1787, %v1381
        %v2051 = vmul.f32 %v1788, %v1382
        %v2052 = vmul.f32 %v1789, %v1383
        %v2053 = vmul.f32 %v1790, %v1384
        %v2054 = vmul.f32 %v1791, %v1385
        %v2055 = vmul.f32 %v1792, %v1386
        %v2056 = vmul.f32 %v1793, %v1387
        %v2057 = vmul.f32 %v1794, %v1388
        %v2058 = vmul.f32 %v1795, %v1389
        %v2059 = vmul.f32 %v1796, %v1390
        %v2060 = vmul.f32 %v1797, %v1391
        %v2061 = vmul.f32 %v1798, %v1392
        %v2062 = vmul.f32 %v1799, %v1393
        %v2063 = vmul.f32 %v1800, %v1394
        %v2064 = vmul.f32 %v1801, %v1395
        %v2065 = vmul.f32 %v1802, %v1396
        %v2066 = vmul.f32 %v1803, %v1397
        %v2067 = vmul.f32 %v1804, %v1398
        %v2068 = vmul.f32 %v1805, %v1399
        %v2069 = vmul.f32 %v1806, %v1400
        %v2070 = vmul.f32 %v1807, %v1401
        %v2071 = vmul.f32 %v1808, %v1402
        %v2072 = vmul.f32 %v1809, %v1403
        %v2073 = vmul.f32 %v1810, %v1404
        %v2074 = vmul.f32 %v1811, %v1405
        %v2075 = vmul.f32 %v1812, %v1406
        %v2076 = vmul.f32 %v1813, %v1407
        %v2077 = vmul.f32 %v1814, %v1408
        %v2078 = vmul.f32 %v1815, %v1409
        %v2079 = vmul.f32 %v1816, %v1410
        %v2080 = vmul.f32 %v1817, %v1411
        %v2081 = vmul.f32 %v1818, %v1412
        %v2082 = vmul.f32 %v1819, %v1413
        %v2083 = vmul.f32 %v1820, %v1414
        %v2084 = vmul.f32 %v1821, %v1415
        %v2085 = vmul.f32 %v1822, %v1416
        %v2086 = vmul.f32 %v1823, %v1417
        %v2087 = vmul.f32 %v1824, %v1418
        %v2088 = vmul.f32 %v1825, %v1419
        %v2089 = vmul.f32 %v1826, %v1420
        %v2090 = vmul.f32 %v1827, %v1421
        %v2091 = vmul.f32 %v1828, %v1422
        %v2092 = vmul.f32 %v1829, %v1423
        %v2093 = vmul.f32 %v1830, %v1424
        %v2094 = vmul.f32 %v1831, %v1425
        %v2095 = vmul.f32 %v1832, %v1426
        %v2096 = vmul.f32 %v1833, %v1427
        %v2097 = vmul.f32 %v1834, %v1428
        %v2098 = vmul.f32 %v1835, %v1429
        %v2099 = vmul.f32 %v1836, %v1430
        %v2100 = vmul.f32 %v1837, %v1431
        %v2101 = vmul.f32 %v1838, %v1432
        %v2102 = vmul.f32 %v1839, %v1433
        %v2103 = vmul.f32 %v1840, %v1434
        %v2104 = vmul.f32 %v1841, %v1435
        %v2105 = vmul.f32 %v1842, %v1436
        %v2106 = vmul.f32 %v1843, %v1437
        %v2107 = vmul.f32 %v1844, %v1438
        %v2108 = vmul.f32 %v1845, %v1439
        %v2109 = vmul.f32 %v1846, %v1440
        %v2110 = vmul.f32 %v1847, %v1441
        %v2111 = vmul.f32 %v1848, %v1442
        %v2112 = vmul.f32 %v1849, %v1443
        %v2113 = vadd.f32 %v2049, %v2051
        %v2114 = vadd.f32 %v2113, %v2053
        %v2115 = vadd.f32 %v2114, %v2055
        %v2116 = vadd.f32 %v2115, %v2057
        %v2117 = vadd.f32 %v2116, %v2059
        %v2118 = vadd.f32 %v2117, %v2061
        %v2119 = vadd.f32 %v2118, %v2063
        %v2120 = vadd.f32 %v2119, %v2065
        %v2121 = vadd.f32 %v2120, %v2067
        %v2122 = vadd.f32 %v2121, %v2069
        %v2123 = vadd.f32 %v2122, %v2071
        %v2124 = vadd.f32 %v2123, %v2073
        %v2125 = vadd.f32 %v2124, %v2075
        %v2126 = vadd.f32 %v2125, %v2077
        %v2127 = vadd.f32 %v2126, %v2079
        %v2128 = vadd.f32 %v2127, %v2081
        %v2129 = vadd.f32 %v2128, %v2083
        %v2130 = vadd.f32 %v2129, %v2085
        %v2131 = vadd.f32 %v2130, %v2087
        %v2132 = vadd.f32 %v2131, %v2089
        %v2133 = vadd.f32 %v2132, %v2091
        %v2134 = vadd.f32 %v2133, %v2093
        %v2135 = vadd.f32 %v2134, %v2095
        %v2136 = vadd.f32 %v2135, %v2097
        %v2137 = vadd.f32 %v2136, %v2099
        %v2138 = vadd.f32 %v2137, %v2101
        %v2139 = vadd.f32 %v2138, %v2103
        %v2140 = vadd.f32 %v2139, %v2105
        %v2141 = vadd.f32 %v2140, %v2107
        %v2142 = vadd.f32 %v2141, %v2109
        %v2143 = vadd.f32 %v2142, %v2111
        %v2144 = vrot.slane %v2143, 4
        %v2145 = vadd.f32 %v2143, %v2144
        %v2146 = vrot.slane %v2145, 2
        %v2147 = vadd.f32 %v2145, %v2146
        %v2148 = vrot.slane %v2147, 1
        %v2149 = vadd.f32 %v2147, %v2148
        %v2150 = vadd.f32 %v2050, %v2052
        %v2151 = vadd.f32 %v2150, %v2054
        %v2152 = vadd.f32 %v2151, %v2056
        %v2153 = vadd.f32 %v2152, %v2058
        %v2154 = vadd.f32 %v2153, %v2060
        %v2155 = vadd.f32 %v2154, %v2062
        %v2156 = vadd.f32 %v2155, %v2064
        %v2157 = vadd.f32 %v2156, %v2066
        %v2158 = vadd.f32 %v2157, %v2068
        %v2159 = vadd.f32 %v2158, %v2070
        %v2160 = vadd.f32 %v2159, %v2072
        %v2161 = vadd.f32 %v2160, %v2074
        %v2162 = vadd.f32 %v2161, %v2076
        %v2163 = vadd.f32 %v2162, %v2078
        %v2164 = vadd.f32 %v2163, %v2080
        %v2165 = vadd.f32 %v2164, %v2082
        %v2166 = vadd.f32 %v2165, %v2084
        %v2167 = vadd.f32 %v2166, %v2086
        %v2168 = vadd.f32 %v2167, %v2088
        %v2169 = vadd.f32 %v2168, %v2090
        %v2170 = vadd.f32 %v2169, %v2092
        %v2171 = vadd.f32 %v2170, %v2094
        %v2172 = vadd.f32 %v2171, %v2096
        %v2173 = vadd.f32 %v2172, %v2098
        %v2174 = vadd.f32 %v2173, %v2100
        %v2175 = vadd.f32 %v2174, %v2102
        %v2176 = vadd.f32 %v2175, %v2104
        %v2177 = vadd.f32 %v2176, %v2106
        %v2178 = vadd.f32 %v2177, %v2108
        %v2179 = vadd.f32 %v2178, %v2110
        %v2180 = vadd.f32 %v2179, %v2112
        %v2181 = vrot.slane %v2180, 4
        %v2182 = vadd.f32 %v2180, %v2181
        %v2183 = vrot.slane %v2182, 2
        %v2184 = vadd.f32 %v2182, %v2183
        %v2185 = vrot.slane %v2184, 1
        %v2186 = vadd.f32 %v2184, %v2185
        %v2187 = vsub.f32 %v2047, %v2149
        %v2188 = vsub.f32 %v2048, %v2186
        %v2189 = vld [vmem:[%s481] sm:$0x1]
        %v2190 = vadd.f32 %v2187, %v2188
        %2191 = vadd.xlane.f32.xlu0 %v2190
        %v2192 = vpop.xlane.xlu0 %2191
        %v2193 = vadd.f32 %v2189, %v2192
        %vm2194 = vcmask 0
        %2195 = vst.msk [vmem:[%s481] sm:$0x1] %vm2194, %v2193
        %v2196 = vsub.f32 %v611, %v617
        %v2197 = vsub.f32 %v613, %v618
        %v2198 = vmul.f32 %v2196, %v2196
        %v2199 = vmul.f32 %v2197, %v2197
        %v2200 = vrot.slane %v2198, 4
        %v2201 = vadd.f32 %v2198, %v2200
        %v2202 = vrot.slane %v2201, 2
        %v2203 = vadd.f32 %v2201, %v2202
        %v2204 = vrot.slane %v2203, 1
        %v2205 = vadd.f32 %v2203, %v2204
        %v2206 = vrot.slane %v2199, 4
        %v2207 = vadd.f32 %v2199, %v2206
        %v2208 = vrot.slane %v2207, 2
        %v2209 = vadd.f32 %v2207, %v2208
        %v2210 = vrot.slane %v2209, 1
        %v2211 = vadd.f32 %v2209, %v2210
        %v2212 = vld [vmem:[%s484] sm:$0x1]
        %v2213 = vadd.f32 %v2205, %v2211
        %2214 = vadd.xlane.f32.xlu0 %v2213
        %v2215 = vpop.xlane.xlu0 %2214
        %v2216 = vadd.f32 %v2212, %v2215
        %2217 = vst.msk [vmem:[%s484] sm:$0x1] %vm2194, %v2216
        %s2218 = sand.u32 %s227, 1
        %s2219 = scalar_lea.sflag [#allocation3], %s2218
        %s2220 = sand.u32 %s227, 1
        %s2221 = smul.addr %s2220, 64
        %s2222 = scalar_lea.vmem [#allocation2], %s2221
        %s2223 = sand.u32 %s255, 1
        %s2224 = scalar_lea.sflag [#allocation5], %s2223
        %s2225 = sand.u32 %s255, 1
        %s2226 = smul.addr %s2225, 2
        %s2227 = scalar_lea.vmem [#allocation4], %s2226
        %p2228 = scmp.lt.s32.totalorder %s34, 1
        %s2229 = scalar_select %p2228, %s34, 1
        %s2230 = smul.addr %s2229, 32
        %s2231 = smul.addr %s2230, 8
        %s2232 = scalar_lea.vmem %s10, %s2231
        %p2233 = scmp.lt.s32.totalorder %s34, 1
        %s2234 = scalar_select %p2233, %s34, 1
        %s2235 = scalar_lea.vmem %s11, %s2234
        %p2236 = scmp.lt.s32.totalorder %s34, 1
        %s2237 = scalar_select %p2236, %s34, 1
        %s2238 = scalar_lea.vmem %s12, %s2237
        // Predicated region
        $region57: #{tpu_custom_call.1} parent=51 // pred_check
          %p2239 = pneg %p237
        $region58: #{tpu_custom_call.1} parent=51 // pred_check_branch
          %2241 = sbr.rel (%p2239) target = $region60
        $region59: #{tpu_custom_call.1} parent=51 // pred_region
          %s2242 = smul.u32 2, %s35
          %s2244 = ssub.s32 1024, 1024
          %2245 = vsyncadd %s2219, %s2244
          %s2246 = smul.addr %s34, 8
          %s2247 = sadd.s32 %s2242, %s2246
          %s2248 = smul.addr %s2247, 128
          %s2249 = scalar_lea.hbm %s8, %s2248
          %s2250 = sshll.u32 %s2222, 4
          %s2251 = int_to_ptr.vmem [resolvable:$true] %s2250
          %2256 = dma.vmem_to_hbm [thread:$0]  %s2251, 1024, %s2249, %s2219, 256, 256, 16
        $region60: #{tpu_custom_call.1} parent=51 // pred_fallthru
          _
        // Predicated region
        $region61: #{tpu_custom_call.1} parent=51 // pred_check
          %p2257 = pneg %p265
        $region62: #{tpu_custom_call.1} parent=51 // pred_check_branch
          %2259 = sbr.rel (%p2257) target = $region64
        $region63: #{tpu_custom_call.1} parent=51 // pred_region
          %s2260 = smul.u32 2, %s35
          %s2262 = ssub.s32 32, 32
          %2263 = vsyncadd %s2224, %s2262
          %s2264 = smul.addr %s34, 2
          %s2265 = sadd.s32 %s2260, %s2264
          %s2266 = smul.addr %s2265, 16
          %s2267 = scalar_lea.hbm %s9, %s2266
          %s2269 = sshll.u32 %s2227, 4
          %s2270 = int_to_ptr.vmem [resolvable:$true] %s2269
          %2272 = dma.vmem_to_hbm [thread:$0]  %s2270, 32, %s2267, %s2224
        $region64: #{tpu_custom_call.1} parent=51 // pred_fallthru
          _
        // Predicated region
        $region65: #{tpu_custom_call.1} parent=51 // pred_check
          %p2273 = pneg %p291
        $region66: #{tpu_custom_call.1} parent=51 // pred_check_branch
          %2275 = sbr.rel (%p2273) target = $region68
        $region67: #{tpu_custom_call.1} parent=51 // pred_region
          _
        $region68: #{tpu_custom_call.1} parent=51 // pred_fallthru
          _
        // Predicated region
        $region69: #{tpu_custom_call.1} parent=51 // pred_check
          %p2276 = pneg %p317
        $region70: #{tpu_custom_call.1} parent=51 // pred_check_branch
          %2278 = sbr.rel (%p2276) target = $region72
        $region71: #{tpu_custom_call.1} parent=51 // pred_region
          _
        $region72: #{tpu_custom_call.1} parent=51 // pred_fallthru
          _
        // Predicated region
        $region73: #{tpu_custom_call.1} parent=51 // pred_check
          %p2279 = pneg %p343
        $region74: #{tpu_custom_call.1} parent=51 // pred_check_branch
          %2281 = sbr.rel (%p2279) target = $region76
        $region75: #{tpu_custom_call.1} parent=51 // pred_region
          _
        $region76: #{tpu_custom_call.1} parent=51 // pred_fallthru
          _
      $region52: #{tpu_custom_call.1} parent=5 // pred_fallthru
        _
      %p2282 = scmp.le.s32.totalorder 2, %s25
      // Predicated region
      $region77: #{tpu_custom_call.1} parent=5 // pred_check
        %p2283 = pneg %p2282
      $region78: #{tpu_custom_call.1} parent=5 // pred_check_branch
        %2285 = sbr.rel (%p2283) target = $region80
      $region79: #{tpu_custom_call.1} parent=5 // pred_region
        %s2286 = ssub.s32 %s25, 2
        // Predicated region
        $region81: #{tpu_custom_call.1} parent=79 // pred_check
          %p2287 = pneg %p243
        $region82: #{tpu_custom_call.1} parent=79 // pred_check_branch
          %2289 = sbr.rel (%p2287) target = $region84
        $region83: #{tpu_custom_call.1} parent=79 // pred_region
          %s2290 = sand.u32 %s228, 1
          %s2291 = scalar_lea.sflag [#allocation3], %s2290
          %s2292 = sand.u32 %s228, 1
          %s2293 = smul.addr %s2292, 64
          %s2294 = scalar_lea.vmem [#allocation2], %s2293
          %2295 = dma.done %s2291, 1024
        $region84: #{tpu_custom_call.1} parent=79 // pred_fallthru
          _
        // Predicated region
        $region85: #{tpu_custom_call.1} parent=79 // pred_check
          %p2296 = pneg %p271
        $region86: #{tpu_custom_call.1} parent=79 // pred_check_branch
          %2298 = sbr.rel (%p2296) target = $region88
        $region87: #{tpu_custom_call.1} parent=79 // pred_region
          %s2299 = sand.u32 %s256, 1
          %s2300 = scalar_lea.sflag [#allocation5], %s2299
          %s2301 = sand.u32 %s256, 1
          %s2302 = smul.addr %s2301, 2
          %s2303 = scalar_lea.vmem [#allocation4], %s2302
          %2304 = dma.done %s2300, 32
        $region88: #{tpu_custom_call.1} parent=79 // pred_fallthru
          _
        // Predicated region
        $region89: #{tpu_custom_call.1} parent=79 // pred_check
          %p2305 = pneg %p297
        $region90: #{tpu_custom_call.1} parent=79 // pred_check_branch
          %2307 = sbr.rel (%p2305) target = $region92
        $region91: #{tpu_custom_call.1} parent=79 // pred_region
          %p2308 = scmp.lt.s32.totalorder %s36, 1
          %s2309 = scalar_select %p2308, %s36, 1
          %s2310 = smul.addr %s2309, 32
          %s2311 = smul.addr %s2310, 8
          %s2312 = scalar_lea.vmem %s10, %s2311
        $region92: #{tpu_custom_call.1} parent=79 // pred_fallthru
          _
        // Predicated region
        $region93: #{tpu_custom_call.1} parent=79 // pred_check
          %p2313 = pneg %p323
        $region94: #{tpu_custom_call.1} parent=79 // pred_check_branch
          %2315 = sbr.rel (%p2313) target = $region96
        $region95: #{tpu_custom_call.1} parent=79 // pred_region
          %p2316 = scmp.lt.s32.totalorder %s36, 1
          %s2317 = scalar_select %p2316, %s36, 1
          %s2318 = scalar_lea.vmem %s11, %s2317
        $region96: #{tpu_custom_call.1} parent=79 // pred_fallthru
          _
        // Predicated region
        $region97: #{tpu_custom_call.1} parent=79 // pred_check
          %p2319 = pneg %p349
        $region98: #{tpu_custom_call.1} parent=79 // pred_check_branch
          %2321 = sbr.rel (%p2319) target = $region100
        $region99: #{tpu_custom_call.1} parent=79 // pred_region
          %p2322 = scmp.lt.s32.totalorder %s36, 1
          %s2323 = scalar_select %p2322, %s36, 1
          %s2324 = scalar_lea.vmem %s12, %s2323
        $region100: #{tpu_custom_call.1} parent=79 // pred_fallthru
          _
      $region80: #{tpu_custom_call.1} parent=5 // pred_fallthru
        _
    $region6: #{tpu_custom_call.1} parent=1 // loop_footer
      %s29 = sadd.s32 1, %s25
    $region7: #{tpu_custom_call.1} parent=1 // loop_footer_branch
      %24 = sbr.rel target = $region3
    $region8: #{tpu_custom_call.1} parent=1 // loop_exit
      _
    %2325 = vsyncpa [#allocation3], 1
    %s2326 = scalar_lea.sflag [#allocation3], 1
    %2327 = vsyncpa %s2326, 1
    %2328 = vsyncpa [#allocation5], 1
    %s2329 = scalar_lea.sflag [#allocation5], 1
    %2330 = vsyncpa %s2329, 1

</llo_original>
